<compile_context>
chip_gen: v7x
topology: tpu7x:2x2x1
jax: 0.10.0
libtpu: 0.0.40
codegen_flags: <defaults>
</compile_context>

<pallas_src>
import jax
import jax.numpy as jnp
from jax.experimental import pallas as pl
from jax.experimental.pallas import tpu as pltpu

# ---------------- model hyper-params (TrainArgs equivalents) ----------------
B = 16           # batch of molecules
BM = 8           # molecules per grid step (batch tile)
A = 8            # padded atoms per molecule
F_ATOM = 16      # atom feature dim
HIDDEN = 32      # args.hidden_size
DEPTH = 3        # args.depth (message passing steps)
FFN_HIDDEN = 32  # args.ffn_hidden_size
FFN_LAYERS = 2   # args.ffn_num_layers
NUM_TASKS = 1    # args.num_tasks
OUT_PAD = 128    # lane-dense padded output width (sliced back to NUM_TASKS outside)
BMA = BM * A     # atoms per grid step (flattened)
# dataset_type == 'classification', model in eval mode -> sigmoid on output
# dropout is identity in eval mode


def _relu(x):
    return jnp.maximum(x, 0.0)


def molecule_model_kernel(
    x_ref, adj_ref, mask_ref,
    wi_ref, wh_ref, wof_ref, wom_ref, bo_ref,
    w1_ref, b1_ref, w2_ref, b2_ref,
    out_ref,
):
    # Loads hoisted once per grid step (weights stay resident across steps).
    x2 = x_ref[...]                             # (BMA, F)    bf16, atoms flattened
    adj = adj_ref[...]                          # (BMA, BMA)  bf16, block-diagonal
    mask = mask_ref[...]                        # (BM, A)     f32
    wi, wh = wi_ref[...], wh_ref[...]           # bf16
    wof, wom = wof_ref[...], wom_ref[...]       # bf16
    bo = bo_ref[...]                            # (1, H)      f32
    w1, b1 = w1_ref[...], b1_ref[...]
    w2, b2 = w2_ref[...], b2_ref[...]

    # input0 = W_i(f_atoms); h = ReLU(input0)
    input0 = jnp.dot(x2, wi, preferred_element_type=jnp.float32)      # (BMA, H) f32
    h = _relu(input0)

    # message passing: h <- ReLU(input0 + W_h(adj @ h))
    # block-diagonal adj makes the per-molecule aggregation a single MXU matmul.
    for _ in range(DEPTH - 1):
        agg = jnp.dot(adj, h.astype(jnp.bfloat16),
                      preferred_element_type=jnp.float32)             # (BMA, H)
        m = jnp.dot(agg.astype(jnp.bfloat16), wh,
                    preferred_element_type=jnp.float32)
        h = _relu(input0 + m)

    # atom_h = ReLU(W_o([f_atoms, adj @ h]) + b_o)  (W_o split into W_o_f / W_o_m)
    agg = jnp.dot(adj, h.astype(jnp.bfloat16),
                  preferred_element_type=jnp.float32)
    m_final = jnp.dot(agg.astype(jnp.bfloat16), wom,
                      preferred_element_type=jnp.float32)
    atom_h = _relu(
        jnp.dot(x2, wof, preferred_element_type=jnp.float32) + m_final + bo)

    # readout: masked mean over atoms -> molecule vector (BM, HIDDEN)
    atom_h = atom_h.reshape(BM, A, HIDDEN) * mask[:, :, None]
    denom = jnp.maximum(jnp.sum(mask, axis=1, keepdims=True), 1.0)     # (BM, 1)
    mol_vec = jnp.sum(atom_h, axis=1) * pl.reciprocal(denom, approx=True)

    # ---------------- FFN (dropout is identity in eval mode) ----------------
    hid = _relu(jnp.dot(mol_vec.astype(jnp.bfloat16), w1,
                        preferred_element_type=jnp.float32) + b1)
    logits = jnp.dot(hid.astype(jnp.bfloat16), w2,
                     preferred_element_type=jnp.float32) + b2          # (BM, OUT_PAD)

    # classification + eval mode -> sigmoid (tanh form: numerically stable, EUP slot)
    out_ref[...] = 0.5 * (jnp.tanh(0.5 * logits) + 1.0)


def molecule_model_forward(x, adj, mask, params):
    """x: (B, A, F) bf16, adj: (B, A, A) bf16 (0/1), mask: (B, A) f32."""
    wi, wh, wof, wom, bo, w1, b1, w2, b2 = params
    nb = B // BM

    # --- wrapper-side layout plumbing (no compute hoisted) ---
    # flatten atoms so every shared-weight matmul sees a tall MXU operand
    x_flat = x.reshape(B * A, F_ATOM)
    # pack the batched adjacency into a block-diagonal matrix per batch tile:
    # adj_bd[n, I*A+a, J*A+b] = adj[n*BM+I, a, b] * (I == J)
    eye = jnp.eye(BM, dtype=adj.dtype)
    adj_bd = jnp.einsum('nIab,IJ->nIaJb', adj.reshape(nb, BM, A, A), eye)
    adj_bd = adj_bd.reshape(nb, BMA, BMA)

    def const_spec(arr):
        # weights: DMA'd once, resident across grid steps
        return pl.BlockSpec(arr.shape, lambda i: (0, 0))

    in_specs = [
        pl.BlockSpec((BMA, F_ATOM),      lambda i: (i, 0)),      # flattened atom tile
        pl.BlockSpec((None, BMA, BMA),   lambda i: (i, 0, 0)),   # block-diag adj tile
        pl.BlockSpec((BM, A),            lambda i: (i, 0)),      # mask tile
        const_spec(wi), const_spec(wh), const_spec(wof), const_spec(wom),
        const_spec(bo), const_spec(w1), const_spec(b1), const_spec(w2),
        const_spec(b2),
    ]
    out_specs = pl.BlockSpec((BM, OUT_PAD), lambda i: (i, 0))

    out_padded = pl.pallas_call(
        molecule_model_kernel,
        out_shape=jax.ShapeDtypeStruct((B, OUT_PAD), jnp.float32),
        grid=(nb,),
        in_specs=in_specs,
        out_specs=out_specs,
        compiler_params=pltpu.CompilerParams(
            # batch axis is independent -> shard across TCs on v7x, pipeline everywhere
            dimension_semantics=("parallel",),
        ),
    )(x_flat, adj_bd, mask, wi, wh, wof, wom, bo, w1, b1, w2, b2)
    # strip the lane padding down to the real task count
    return out_padded[:, :NUM_TASKS]


def init_params(key):
    ks = jax.random.split(key, 6)
    scale = 0.1
    # MXU operands in bf16 (f32 accumulation in-kernel), biases in f32
    w_i = (scale * jax.random.normal(ks[0], (F_ATOM, HIDDEN))).astype(jnp.bfloat16)
    w_h = (scale * jax.random.normal(ks[1], (HIDDEN, HIDDEN))).astype(jnp.bfloat16)
    # W_o acts on concat([f_atoms, message]) -> split into two matrices
    w_o_f = (scale * jax.random.normal(ks[2], (F_ATOM, HIDDEN))).astype(jnp.bfloat16)
    w_o_m = (scale * jax.random.normal(ks[3], (HIDDEN, HIDDEN))).astype(jnp.bfloat16)
    b_o = jnp.zeros((1, HIDDEN), jnp.float32)
    w1 = (scale * jax.random.normal(ks[4], (HIDDEN, FFN_HIDDEN))).astype(jnp.bfloat16)
    b1 = jnp.zeros((1, FFN_HIDDEN), jnp.float32)
    # output weight padded to a lane-dense width; padded columns are zero (discarded)
    w2 = scale * jax.random.normal(ks[5], (FFN_HIDDEN, NUM_TASKS), jnp.float32)
    w2 = jnp.pad(w2, ((0, 0), (0, OUT_PAD - NUM_TASKS))).astype(jnp.bfloat16)
    b2 = jnp.zeros((1, OUT_PAD), jnp.float32)
    return (w_i, w_h, w_o_f, w_o_m, b_o, w1, b1, w2, b2)


def reference_forward(x, adj, mask, params):
    """Pure-JAX f32 reference of the same forward pass (for a tolerance check)."""
    wi, wh, wof, wom, bo, w1, b1, w2, b2 = params
    wi, wh, wof, wom, w1, w2 = [
        w.astype(jnp.float32) for w in (wi, wh, wof, wom, w1, w2)]
    input0 = jnp.einsum('baf,fh->bah', x, wi)
    h = jnp.maximum(input0, 0.0)
    for _ in range(DEPTH - 1):
        m = jnp.einsum('bij,bjh->bih', adj, h) @ wh
        h = jnp.maximum(input0 + m, 0.0)
    m = jnp.einsum('bij,bjh->bih', adj, h) @ wom
    atom_h = jnp.maximum(jnp.einsum('baf,fh->bah', x, wof) + m + bo, 0.0)
    atom_h = atom_h * mask[:, :, None]
    denom = jnp.maximum(jnp.sum(mask, axis=1, keepdims=True), 1.0)
    mol_vec = jnp.sum(atom_h, axis=1) / denom
    hid = jnp.maximum(mol_vec @ w1 + b1, 0.0)
    logits = hid @ w2 + b2
    return jax.nn.sigmoid(logits)[:, :NUM_TASKS]


if __name__ == "__main__":
    key = jax.random.PRNGKey(0)
    k_x, k_adj, k_n, k_p = jax.random.split(key, 4)

    # deterministic synthetic "molecule" batch
    x = jax.random.normal(k_x, (B, A, F_ATOM), jnp.float32)

    # random symmetric 0/1 adjacency (no self loops), padding atoms disconnected
    raw = jax.random.uniform(k_adj, (B, A, A))
    adj = (raw + jnp.swapaxes(raw, 1, 2) > 1.0).astype(jnp.float32)
    adj = adj * (1.0 - jnp.eye(A, dtype=jnp.float32))[None]

    # variable atom counts per molecule (rest is padding)
    n_atoms = jax.random.randint(k_n, (B,), 3, A + 1)
    mask = (jnp.arange(A)[None, :] < n_atoms[:, None]).astype(jnp.float32)
    adj = adj * mask[:, :, None] * mask[:, None, :]

    params = init_params(k_p)

    out = molecule_model_forward(
        x.astype(jnp.bfloat16), adj.astype(jnp.bfloat16), mask, params)
    out = jax.block_until_ready(out)

    ref = reference_forward(x, adj, mask, params)

    assert out.shape == (B, NUM_TASKS)
    assert bool(jnp.all(jnp.isfinite(out)))
    assert bool(jnp.all((out >= 0.0) & (out <= 1.0)))
    assert bool(jnp.max(jnp.abs(out - ref)) < 3e-2), (
        f"max |kernel - ref| = {float(jnp.max(jnp.abs(out - ref)))}")
    print("KERNEL_OK")
</pallas_src>

<mosaic_0001>
module attributes {stable_mosaic.version = 11 : i64} {
  func.func @molecule_model_kernel(%arg0: i32, %arg1: memref<64x16xbf16, #tpu.memory_space<vmem>>, %arg2: memref<1x64x64xbf16, #tpu.memory_space<vmem>>, %arg3: memref<8x8xf32, #tpu.memory_space<vmem>>, %arg4: memref<16x32xbf16, #tpu.memory_space<vmem>>, %arg5: memref<32x32xbf16, #tpu.memory_space<vmem>>, %arg6: memref<16x32xbf16, #tpu.memory_space<vmem>>, %arg7: memref<32x32xbf16, #tpu.memory_space<vmem>>, %arg8: memref<1x32xf32, #tpu.memory_space<vmem>>, %arg9: memref<32x32xbf16, #tpu.memory_space<vmem>>, %arg10: memref<1x32xf32, #tpu.memory_space<vmem>>, %arg11: memref<32x128xbf16, #tpu.memory_space<vmem>>, %arg12: memref<1x128xf32, #tpu.memory_space<vmem>>, %arg13: memref<8x128xf32, #tpu.memory_space<vmem>>) attributes {dimension_semantics = [#tpu.dimension_semantics<parallel>], iteration_bounds = array<i64: 2>, scalar_prefetch = 0 : i64, scratch_operands = 0 : i64, tpu.core_type = #tpu.core_type<tc>, window_params = [{transform_indices = @transform_0, window_bounds = array<i64: 64, 16>}, {transform_indices = @transform_1, window_bounds = array<i64: 1, 64, 64>}, {transform_indices = @transform_2, window_bounds = array<i64: 8, 8>}, {pipeline_mode = #tpu.pipeline_mode<synchronous>, transform_indices = @transform_3, window_bounds = array<i64: 16, 32>}, {pipeline_mode = #tpu.pipeline_mode<synchronous>, transform_indices = @transform_4, window_bounds = array<i64: 32, 32>}, {pipeline_mode = #tpu.pipeline_mode<synchronous>, transform_indices = @transform_5, window_bounds = array<i64: 16, 32>}, {pipeline_mode = #tpu.pipeline_mode<synchronous>, transform_indices = @transform_6, window_bounds = array<i64: 32, 32>}, {pipeline_mode = #tpu.pipeline_mode<synchronous>, transform_indices = @transform_7, window_bounds = array<i64: 1, 32>}, {pipeline_mode = #tpu.pipeline_mode<synchronous>, transform_indices = @transform_8, window_bounds = array<i64: 32, 32>}, {pipeline_mode = #tpu.pipeline_mode<synchronous>, transform_indices = @transform_9, window_bounds = array<i64: 1, 32>}, {pipeline_mode = #tpu.pipeline_mode<synchronous>, transform_indices = @transform_10, window_bounds = array<i64: 32, 128>}, {pipeline_mode = #tpu.pipeline_mode<synchronous>, transform_indices = @transform_11, window_bounds = array<i64: 1, 128>}, {transform_indices = @transform_12, window_bounds = array<i64: 8, 128>}]} {
    %c0 = arith.constant 0 : index
    %c0_0 = arith.constant 0 : index
    %0 = vector.load %arg1[%c0, %c0_0] : memref<64x16xbf16, #tpu.memory_space<vmem>>, vector<64x16xbf16>
    %c0_1 = arith.constant 0 : index
    %c0_2 = arith.constant 0 : index
    %c0_3 = arith.constant 0 : index
    %1 = vector.load %arg2[%c0_1, %c0_2, %c0_3] : memref<1x64x64xbf16, #tpu.memory_space<vmem>>, vector<1x64x64xbf16>
    %2 = vector.shape_cast %1 : vector<1x64x64xbf16> to vector<64x64xbf16>
    %c0_4 = arith.constant 0 : index
    %c0_5 = arith.constant 0 : index
    %3 = vector.load %arg3[%c0_4, %c0_5] : memref<8x8xf32, #tpu.memory_space<vmem>>, vector<8x8xf32>
    %c0_6 = arith.constant 0 : index
    %c0_7 = arith.constant 0 : index
    %4 = vector.load %arg4[%c0_6, %c0_7] : memref<16x32xbf16, #tpu.memory_space<vmem>>, vector<16x32xbf16>
    %c0_8 = arith.constant 0 : index
    %c0_9 = arith.constant 0 : index
    %5 = vector.load %arg5[%c0_8, %c0_9] : memref<32x32xbf16, #tpu.memory_space<vmem>>, vector<32x32xbf16>
    %c0_10 = arith.constant 0 : index
    %c0_11 = arith.constant 0 : index
    %6 = vector.load %arg6[%c0_10, %c0_11] : memref<16x32xbf16, #tpu.memory_space<vmem>>, vector<16x32xbf16>
    %c0_12 = arith.constant 0 : index
    %c0_13 = arith.constant 0 : index
    %7 = vector.load %arg7[%c0_12, %c0_13] : memref<32x32xbf16, #tpu.memory_space<vmem>>, vector<32x32xbf16>
    %c0_14 = arith.constant 0 : index
    %c0_15 = arith.constant 0 : index
    %8 = vector.load %arg8[%c0_14, %c0_15] : memref<1x32xf32, #tpu.memory_space<vmem>>, vector<1x32xf32>
    %c0_16 = arith.constant 0 : index
    %c0_17 = arith.constant 0 : index
    %9 = vector.load %arg9[%c0_16, %c0_17] : memref<32x32xbf16, #tpu.memory_space<vmem>>, vector<32x32xbf16>
    %c0_18 = arith.constant 0 : index
    %c0_19 = arith.constant 0 : index
    %10 = vector.load %arg10[%c0_18, %c0_19] : memref<1x32xf32, #tpu.memory_space<vmem>>, vector<1x32xf32>
    %c0_20 = arith.constant 0 : index
    %c0_21 = arith.constant 0 : index
    %11 = vector.load %arg11[%c0_20, %c0_21] : memref<32x128xbf16, #tpu.memory_space<vmem>>, vector<32x128xbf16>
    %c0_22 = arith.constant 0 : index
    %c0_23 = arith.constant 0 : index
    %12 = vector.load %arg12[%c0_22, %c0_23] : memref<1x128xf32, #tpu.memory_space<vmem>>, vector<1x128xf32>
    %cst = arith.constant dense<0.000000e+00> : vector<64x32xf32>
    %13 = tpu.matmul %0, %4, %cst {dimension_numbers = #tpu.dot_dimension_numbers<[1], [0], [0], [1], [0, 0, 1, 1], [], []>} : vector<64x16xbf16>, vector<16x32xbf16>, vector<64x32xf32> -> vector<64x32xf32>
    %cst_24 = arith.constant 0.000000e+00 : f32
    %14 = vector.broadcast %cst_24 : f32 to vector<64x32xf32>
    %15 = arith.maximumf %13, %14 : vector<64x32xf32>
    %16 = arith.truncf %15 : vector<64x32xf32> to vector<64x32xbf16>
    %cst_25 = arith.constant dense<0.000000e+00> : vector<64x32xf32>
    %17 = tpu.matmul %2, %16, %cst_25 {dimension_numbers = #tpu.dot_dimension_numbers<[1], [0], [0], [1], [0, 0, 1, 1], [], []>} : vector<64x64xbf16>, vector<64x32xbf16>, vector<64x32xf32> -> vector<64x32xf32>
    %18 = arith.truncf %17 : vector<64x32xf32> to vector<64x32xbf16>
    %cst_26 = arith.constant dense<0.000000e+00> : vector<64x32xf32>
    %19 = tpu.matmul %18, %5, %cst_26 {dimension_numbers = #tpu.dot_dimension_numbers<[1], [0], [0], [1], [0, 0, 1, 1], [], []>} : vector<64x32xbf16>, vector<32x32xbf16>, vector<64x32xf32> -> vector<64x32xf32>
    %20 = arith.addf %13, %19 : vector<64x32xf32>
    %cst_27 = arith.constant 0.000000e+00 : f32
    %21 = vector.broadcast %cst_27 : f32 to vector<64x32xf32>
    %22 = arith.maximumf %20, %21 : vector<64x32xf32>
    %23 = arith.truncf %22 : vector<64x32xf32> to vector<64x32xbf16>
    %cst_28 = arith.constant dense<0.000000e+00> : vector<64x32xf32>
    %24 = tpu.matmul %2, %23, %cst_28 {dimension_numbers = #tpu.dot_dimension_numbers<[1], [0], [0], [1], [0, 0, 1, 1], [], []>} : vector<64x64xbf16>, vector<64x32xbf16>, vector<64x32xf32> -> vector<64x32xf32>
    %25 = arith.truncf %24 : vector<64x32xf32> to vector<64x32xbf16>
    %cst_29 = arith.constant dense<0.000000e+00> : vector<64x32xf32>
    %26 = tpu.matmul %25, %5, %cst_29 {dimension_numbers = #tpu.dot_dimension_numbers<[1], [0], [0], [1], [0, 0, 1, 1], [], []>} : vector<64x32xbf16>, vector<32x32xbf16>, vector<64x32xf32> -> vector<64x32xf32>
    %27 = arith.addf %13, %26 : vector<64x32xf32>
    %cst_30 = arith.constant 0.000000e+00 : f32
    %28 = vector.broadcast %cst_30 : f32 to vector<64x32xf32>
    %29 = arith.maximumf %27, %28 : vector<64x32xf32>
    %30 = arith.truncf %29 : vector<64x32xf32> to vector<64x32xbf16>
    %cst_31 = arith.constant dense<0.000000e+00> : vector<64x32xf32>
    %31 = tpu.matmul %2, %30, %cst_31 {dimension_numbers = #tpu.dot_dimension_numbers<[1], [0], [0], [1], [0, 0, 1, 1], [], []>} : vector<64x64xbf16>, vector<64x32xbf16>, vector<64x32xf32> -> vector<64x32xf32>
    %32 = arith.truncf %31 : vector<64x32xf32> to vector<64x32xbf16>
    %cst_32 = arith.constant dense<0.000000e+00> : vector<64x32xf32>
    %33 = tpu.matmul %32, %7, %cst_32 {dimension_numbers = #tpu.dot_dimension_numbers<[1], [0], [0], [1], [0, 0, 1, 1], [], []>} : vector<64x32xbf16>, vector<32x32xbf16>, vector<64x32xf32> -> vector<64x32xf32>
    %cst_33 = arith.constant dense<0.000000e+00> : vector<64x32xf32>
    %34 = tpu.matmul %0, %6, %cst_33 {dimension_numbers = #tpu.dot_dimension_numbers<[1], [0], [0], [1], [0, 0, 1, 1], [], []>} : vector<64x16xbf16>, vector<16x32xbf16>, vector<64x32xf32> -> vector<64x32xf32>
    %35 = arith.addf %34, %33 : vector<64x32xf32>
    %36 = vector.broadcast %8 : vector<1x32xf32> to vector<64x32xf32>
    %37 = arith.addf %35, %36 : vector<64x32xf32>
    %cst_34 = arith.constant 0.000000e+00 : f32
    %38 = vector.broadcast %cst_34 : f32 to vector<64x32xf32>
    %39 = arith.maximumf %37, %38 : vector<64x32xf32>
    %40 = vector.shape_cast %39 : vector<64x32xf32> to vector<8x8x32xf32>
    %41 = vector.shape_cast %3 : vector<8x8xf32> to vector<8x8x1xf32>
    %42 = vector.broadcast %41 : vector<8x8x1xf32> to vector<8x8x32xf32>
    %43 = arith.mulf %40, %42 : vector<8x8x32xf32>
    %cst_35 = arith.constant dense<0.000000e+00> : vector<8xf32>
    %44 = vector.multi_reduction <add>, %3, %cst_35 [1] : vector<8x8xf32> to vector<8xf32>
    %45 = vector.shape_cast %44 : vector<8xf32> to vector<8x1xf32>
    %cst_36 = arith.constant 1.000000e+00 : f32
    %46 = vector.broadcast %cst_36 : f32 to vector<8x1xf32>
    %47 = arith.maximumf %45, %46 : vector<8x1xf32>
    %cst_37 = arith.constant dense<0.000000e+00> : vector<8x32xf32>
    %48 = vector.multi_reduction <add>, %43, %cst_37 [1] : vector<8x8x32xf32> to vector<8x32xf32>
    %49 = tpu.reciprocal %47 {approx = true} : vector<8x1xf32> -> vector<8x1xf32>
    %50 = vector.broadcast %49 : vector<8x1xf32> to vector<8x32xf32>
    %51 = arith.mulf %48, %50 : vector<8x32xf32>
    %52 = arith.truncf %51 : vector<8x32xf32> to vector<8x32xbf16>
    %cst_38 = arith.constant dense<0.000000e+00> : vector<8x32xf32>
    %53 = tpu.matmul %52, %9, %cst_38 {dimension_numbers = #tpu.dot_dimension_numbers<[1], [0], [0], [1], [0, 0, 1, 1], [], []>} : vector<8x32xbf16>, vector<32x32xbf16>, vector<8x32xf32> -> vector<8x32xf32>
    %54 = vector.broadcast %10 : vector<1x32xf32> to vector<8x32xf32>
    %55 = arith.addf %53, %54 : vector<8x32xf32>
    %cst_39 = arith.constant 0.000000e+00 : f32
    %56 = vector.broadcast %cst_39 : f32 to vector<8x32xf32>
    %57 = arith.maximumf %55, %56 : vector<8x32xf32>
    %58 = arith.truncf %57 : vector<8x32xf32> to vector<8x32xbf16>
    %cst_40 = arith.constant dense<0.000000e+00> : vector<8x128xf32>
    %59 = tpu.matmul %58, %11, %cst_40 {dimension_numbers = #tpu.dot_dimension_numbers<[1], [0], [0], [1], [0, 0, 1, 1], [], []>} : vector<8x32xbf16>, vector<32x128xbf16>, vector<8x128xf32> -> vector<8x128xf32>
    %60 = vector.broadcast %12 : vector<1x128xf32> to vector<8x128xf32>
    %61 = arith.addf %59, %60 : vector<8x128xf32>
    %cst_41 = arith.constant 5.000000e-01 : f32
    %62 = vector.broadcast %cst_41 : f32 to vector<8x128xf32>
    %63 = arith.mulf %62, %61 : vector<8x128xf32>
    %64 = math.tanh %63 : vector<8x128xf32>
    %cst_42 = arith.constant 1.000000e+00 : f32
    %65 = vector.broadcast %cst_42 : f32 to vector<8x128xf32>
    %66 = arith.addf %64, %65 : vector<8x128xf32>
    %cst_43 = arith.constant 5.000000e-01 : f32
    %67 = vector.broadcast %cst_43 : f32 to vector<8x128xf32>
    %68 = arith.mulf %67, %66 : vector<8x128xf32>
    %c0_44 = arith.constant 0 : index
    %c0_45 = arith.constant 0 : index
    %69 = vector.load %arg13[%c0_44, %c0_45] : memref<8x128xf32, #tpu.memory_space<vmem>>, vector<8x128xf32>
    tpu.vector_store %arg13[%c0_44, %c0_45], %68 {strides = array<i32>} : memref<8x128xf32, #tpu.memory_space<vmem>>, vector<8x128xf32>,
    return
  }
  func.func @transform_0(%arg0: i32) -> (i32, i32) {
    %c0_i32 = arith.constant 0 : i32
    %c0_i32_0 = arith.constant 0 : i32
    return %arg0, %c0_i32 : i32, i32
  }
  func.func @transform_1(%arg0: i32) -> (i32, i32, i32) {
    %c0_i32 = arith.constant 0 : i32
    %c0_i32_0 = arith.constant 0 : i32
    %c0_i32_1 = arith.constant 0 : i32
    return %arg0, %c0_i32, %c0_i32_0 : i32, i32, i32
  }
  func.func @transform_2(%arg0: i32) -> (i32, i32) {
    %c0_i32 = arith.constant 0 : i32
    %c0_i32_0 = arith.constant 0 : i32
    return %arg0, %c0_i32 : i32, i32
  }
  func.func @transform_3(%arg0: i32) -> (i32, i32) {
    %c0_i32 = arith.constant 0 : i32
    %c0_i32_0 = arith.constant 0 : i32
    %c0_i32_1 = arith.constant 0 : i32
    return %c0_i32, %c0_i32_0 : i32, i32
  }
  func.func @transform_4(%arg0: i32) -> (i32, i32) {
    %c0_i32 = arith.constant 0 : i32
    %c0_i32_0 = arith.constant 0 : i32
    %c0_i32_1 = arith.constant 0 : i32
    return %c0_i32, %c0_i32_0 : i32, i32
  }
  func.func @transform_5(%arg0: i32) -> (i32, i32) {
    %c0_i32 = arith.constant 0 : i32
    %c0_i32_0 = arith.constant 0 : i32
    %c0_i32_1 = arith.constant 0 : i32
    return %c0_i32, %c0_i32_0 : i32, i32
  }
  func.func @transform_6(%arg0: i32) -> (i32, i32) {
    %c0_i32 = arith.constant 0 : i32
    %c0_i32_0 = arith.constant 0 : i32
    %c0_i32_1 = arith.constant 0 : i32
    return %c0_i32, %c0_i32_0 : i32, i32
  }
  func.func @transform_7(%arg0: i32) -> (i32, i32) {
    %c0_i32 = arith.constant 0 : i32
    %c0_i32_0 = arith.constant 0 : i32
    %c0_i32_1 = arith.constant 0 : i32
    return %c0_i32, %c0_i32_0 : i32, i32
  }
  func.func @transform_8(%arg0: i32) -> (i32, i32) {
    %c0_i32 = arith.constant 0 : i32
    %c0_i32_0 = arith.constant 0 : i32
    %c0_i32_1 = arith.constant 0 : i32
    return %c0_i32, %c0_i32_0 : i32, i32
  }
  func.func @transform_9(%arg0: i32) -> (i32, i32) {
    %c0_i32 = arith.constant 0 : i32
    %c0_i32_0 = arith.constant 0 : i32
    %c0_i32_1 = arith.constant 0 : i32
    return %c0_i32, %c0_i32_0 : i32, i32
  }
  func.func @transform_10(%arg0: i32) -> (i32, i32) {
    %c0_i32 = arith.constant 0 : i32
    %c0_i32_0 = arith.constant 0 : i32
    %c0_i32_1 = arith.constant 0 : i32
    return %c0_i32, %c0_i32_0 : i32, i32
  }
  func.func @transform_11(%arg0: i32) -> (i32, i32) {
    %c0_i32 = arith.constant 0 : i32
    %c0_i32_0 = arith.constant 0 : i32
    %c0_i32_1 = arith.constant 0 : i32
    return %c0_i32, %c0_i32_0 : i32, i32
  }
  func.func @transform_12(%arg0: i32) -> (i32, i32) {
    %c0_i32 = arith.constant 0 : i32
    %c0_i32_0 = arith.constant 0 : i32
    return %arg0, %c0_i32 : i32, i32
  }
}

</mosaic_0001>

<llo_original>
// kernel: tpu_custom_call.1
$region0: #{tpu_custom_call.1}
  #allocation0 [shape = 'u32[]', space=smem, size = 0x4, offset = 0x4, fixed_abs, tag = 'smem constant byte address 0x4 - core index']
  #allocation1 [shape = 'u32[144,128]{1,0:T(1,128)}', space=vmem, size = 0x12000, scoped, tag = 'internal scratch']
  %s0 = inlined_call_operand.vmem [shape: bf16[128,16], index: 0, kind: input, shape index: {}]
  %s1 = inlined_call_operand.vmem [shape: bf16[2,64,64], index: 1, kind: input, shape index: {}]
  %s2 = inlined_call_operand.vmem [shape: f32[16,8], index: 2, kind: input, shape index: {}]
  %s3 = inlined_call_operand.hbm [shape: bf16[16,32], index: 3, kind: input, shape index: {}]
  %s4 = inlined_call_operand.vmem [shape: bf16[32,32], index: 4, kind: input, shape index: {}]
  %s5 = inlined_call_operand.hbm [shape: bf16[16,32], index: 5, kind: input, shape index: {}]
  %s6 = inlined_call_operand.vmem [shape: bf16[32,32], index: 6, kind: input, shape index: {}]
  %s7 = inlined_call_operand.vmem [shape: f32[1,32], index: 7, kind: input, shape index: {}]
  %s8 = inlined_call_operand.vmem [shape: bf16[32,32], index: 8, kind: input, shape index: {}]
  %s9 = inlined_call_operand.vmem [shape: f32[1,32], index: 9, kind: input, shape index: {}]
  %s10 = inlined_call_operand.vmem [shape: bf16[32,128], index: 10, kind: input, shape index: {}]
  %s11 = inlined_call_operand.vmem [shape: f32[1,128], index: 11, kind: input, shape index: {}]
  %s12 = inlined_call_operand.hbm [shape: f32[16,128], index: 12, kind: output, shape index: {}]
  %s13 = sld [smem:[#allocation0]]
  $region89: #{tpu_custom_call.1} parent=0
    _
  %s15 = ssub.s32 1, %s13
  %s16 = scalar_select 0, %s15, %s13
  $region1: #{tpu_custom_call.1} parent=0
    #allocation2 [shape = 'u8[4096]{0}', space=vmem, size = 0x1000, scoped, tag = 'input window, operand 3, single buffered']
    #allocation3 [shape = 's32[2]{0}', space=sflag, size = 0x8, scoped, tag = 'scoped memory for tpu_custom_call.1']
    #allocation4 [shape = 's32[2]{0}', space=sflag, size = 0x8, scoped, tag = 'scoped memory for tpu_custom_call.1']
    #allocation5 [shape = 'u8[4096]{0}', space=vmem, size = 0x1000, scoped, tag = 'input window, operand 5, single buffered']
    #allocation6 [shape = 's32[1]{0}', space=sflag, size = 0x4, scoped, tag = 'scoped memory for tpu_custom_call.1']
    #allocation7 [shape = 'u8[8192]{0}', space=vmem, size = 0x2000, scoped, tag = 'output window, operand 0']
    %17 = vsyncpa [#allocation3], 0
    %18 = vsyncpa [#allocation6], 0
    %19 = vsyncpa [#allocation4], 0
    %s20 = scalar_lea.sflag [#allocation4], 1
    %21 = vsyncpa %s20, 0
    loop: start=0, step=1, limit=4
    $region2: #{tpu_custom_call.1} parent=1 // loop_pre_header
      _
    $region3: #{tpu_custom_call.1} parent=1 // loop_header
      %s23 = sphi 0, %s27
      %p24 = scmp.ge.s32.totalorder %s23, 4
      %s33 = sphi 0, %s35
      %s36 = sphi 0, %s33
      %s37 = sphi 0, %s36
      %s53 = sphi 0, %s37
      %s59 = sphi 0, %s61
      %s62 = sphi 0, %s59
      %s63 = sphi 0, %s62
      %s79 = sphi 0, %s63
      %s85 = sphi 0, %s87
      %s88 = sphi 0, %s85
      %s89 = sphi 0, %s88
      %s105 = sphi 0, %s89
      %s109 = sphi 0, %s109
      %s111 = sphi 0, %s109
      %s112 = sphi 0, %s111
      %s126 = sphi 0, %s112
      %s130 = sphi 0, %s130
      %s132 = sphi 0, %s130
      %s133 = sphi 0, %s132
      %s147 = sphi 0, %s133
      %s151 = sphi 0, %s151
      %s153 = sphi 0, %s151
      %s154 = sphi 0, %s153
      %s168 = sphi 0, %s154
      %s172 = sphi 0, %s172
      %s174 = sphi 0, %s172
      %s175 = sphi 0, %s174
      %s189 = sphi 0, %s175
      %s193 = sphi 0, %s193
      %s195 = sphi 0, %s193
      %s196 = sphi 0, %s195
      %s210 = sphi 0, %s196
      %s214 = sphi 0, %s214
      %s216 = sphi 0, %s214
      %s217 = sphi 0, %s216
      %s231 = sphi 0, %s217
      %s235 = sphi 0, %s235
      %s237 = sphi 0, %s235
      %s238 = sphi 0, %s237
      %s252 = sphi 0, %s238
      %s256 = sphi 0, %s256
      %s258 = sphi 0, %s256
      %s259 = sphi 0, %s258
      %s273 = sphi 0, %s259
      %s277 = sphi 0, %s277
      %s279 = sphi 0, %s277
      %s280 = sphi 0, %s279
      %s294 = sphi 0, %s280
      %s300 = sphi 0, %s302
      %s303 = sphi 0, %s300
      %s304 = sphi 0, %s303
      %s320 = sphi 0, %s304
    $region4: #{tpu_custom_call.1} parent=1 // loop_header_branch
      %26 = sbr.rel (%p24) target = $region8
    $region5: #{tpu_custom_call.1} parent=1 // loop_body
      %s28 = ssub.s32 %s23, 1
      %s29 = ssub.s32 %s23, 2
      %s30 = sadd.s32 %s23, 1
      %s31 = ssub.s32 %s23, %s30
      %p32 = scmp.eq.s32.totalorder %s31, 0
      %s34 = sadd.s32 %s33, 1
      %s35 = scalar_select %p32, %s33, %s34
      %p38 = pneg %p32
      %p39 = scmp.eq.s32.totalorder %s23, 1
      %p40 = por %p38, %p39
      %p41 = scmp.ne.s32.totalorder %s33, %s36
      %p42 = scmp.eq.s32.totalorder %s23, 0
      %p43 = por %p41, %p42
      %p44 = scmp.ne.s32.totalorder %s33, %s36
      %p45 = scmp.eq.s32.totalorder %s28, 1
      %p46 = por %p44, %p45
      %p47 = scmp.ne.s32.totalorder %s36, %s37
      %p48 = scmp.eq.s32.totalorder %s28, 0
      %p49 = por %p47, %p48
      %p50 = scmp.ne.s32.totalorder %s36, %s37
      %p51 = scmp.eq.s32.totalorder %s29, 1
      %p52 = por %p50, %p51
      %p54 = scmp.ne.s32.totalorder %s37, %s53
      %p55 = scmp.eq.s32.totalorder %s29, 0
      %p56 = por %p54, %p55
      %s57 = ssub.s32 %s23, %s30
      %p58 = scmp.eq.s32.totalorder %s57, 0
      %s60 = sadd.s32 %s59, 1
      %s61 = scalar_select %p58, %s59, %s60
      %p64 = pneg %p58
      %p65 = scmp.eq.s32.totalorder %s23, 1
      %p66 = por %p64, %p65
      %p67 = scmp.ne.s32.totalorder %s59, %s62
      %p68 = scmp.eq.s32.totalorder %s23, 0
      %p69 = por %p67, %p68
      %p70 = scmp.ne.s32.totalorder %s59, %s62
      %p71 = scmp.eq.s32.totalorder %s28, 1
      %p72 = por %p70, %p71
      %p73 = scmp.ne.s32.totalorder %s62, %s63
      %p74 = scmp.eq.s32.totalorder %s28, 0
      %p75 = por %p73, %p74
      %p76 = scmp.ne.s32.totalorder %s62, %s63
      %p77 = scmp.eq.s32.totalorder %s29, 1
      %p78 = por %p76, %p77
      %p80 = scmp.ne.s32.totalorder %s63, %s79
      %p81 = scmp.eq.s32.totalorder %s29, 0
      %p82 = por %p80, %p81
      %s83 = ssub.s32 %s23, %s30
      %p84 = scmp.eq.s32.totalorder %s83, 0
      %s86 = sadd.s32 %s85, 1
      %s87 = scalar_select %p84, %s85, %s86
      %p90 = pneg %p84
      %p91 = scmp.eq.s32.totalorder %s23, 1
      %p92 = por %p90, %p91
      %p93 = scmp.ne.s32.totalorder %s85, %s88
      %p94 = scmp.eq.s32.totalorder %s23, 0
      %p95 = por %p93, %p94
      %p96 = scmp.ne.s32.totalorder %s85, %s88
      %p97 = scmp.eq.s32.totalorder %s28, 1
      %p98 = por %p96, %p97
      %p99 = scmp.ne.s32.totalorder %s88, %s89
      %p100 = scmp.eq.s32.totalorder %s28, 0
      %p101 = por %p99, %p100
      %p102 = scmp.ne.s32.totalorder %s88, %s89
      %p103 = scmp.eq.s32.totalorder %s29, 1
      %p104 = por %p102, %p103
      %p106 = scmp.ne.s32.totalorder %s89, %s105
      %p107 = scmp.eq.s32.totalorder %s29, 0
      %p108 = por %p106, %p107
      %s110 = sadd.s32 %s109, 1
      %p113 = scmp.eq.s32.totalorder %s23, 1
      %p114 = scmp.ne.s32.totalorder %s109, %s111
      %p115 = scmp.eq.s32.totalorder %s23, 0
      %p116 = por %p114, %p115
      %p117 = scmp.ne.s32.totalorder %s109, %s111
      %p118 = scmp.eq.s32.totalorder %s28, 1
      %p119 = por %p117, %p118
      %p120 = scmp.ne.s32.totalorder %s111, %s112
      %p121 = scmp.eq.s32.totalorder %s28, 0
      %p122 = por %p120, %p121
      %p123 = scmp.ne.s32.totalorder %s111, %s112
      %p124 = scmp.eq.s32.totalorder %s29, 1
      %p125 = por %p123, %p124
      %p127 = scmp.ne.s32.totalorder %s112, %s126
      %p128 = scmp.eq.s32.totalorder %s29, 0
      %p129 = por %p127, %p128
      %s131 = sadd.s32 %s130, 1
      %p134 = scmp.eq.s32.totalorder %s23, 1
      %p135 = scmp.ne.s32.totalorder %s130, %s132
      %p136 = scmp.eq.s32.totalorder %s23, 0
      %p137 = por %p135, %p136
      %p138 = scmp.ne.s32.totalorder %s130, %s132
      %p139 = scmp.eq.s32.totalorder %s28, 1
      %p140 = por %p138, %p139
      %p141 = scmp.ne.s32.totalorder %s132, %s133
      %p142 = scmp.eq.s32.totalorder %s28, 0
      %p143 = por %p141, %p142
      %p144 = scmp.ne.s32.totalorder %s132, %s133
      %p145 = scmp.eq.s32.totalorder %s29, 1
      %p146 = por %p144, %p145
      %p148 = scmp.ne.s32.totalorder %s133, %s147
      %p149 = scmp.eq.s32.totalorder %s29, 0
      %p150 = por %p148, %p149
      %s152 = sadd.s32 %s151, 1
      %p155 = scmp.eq.s32.totalorder %s23, 1
      %p156 = scmp.ne.s32.totalorder %s151, %s153
      %p157 = scmp.eq.s32.totalorder %s23, 0
      %p158 = por %p156, %p157
      %p159 = scmp.ne.s32.totalorder %s151, %s153
      %p160 = scmp.eq.s32.totalorder %s28, 1
      %p161 = por %p159, %p160
      %p162 = scmp.ne.s32.totalorder %s153, %s154
      %p163 = scmp.eq.s32.totalorder %s28, 0
      %p164 = por %p162, %p163
      %p165 = scmp.ne.s32.totalorder %s153, %s154
      %p166 = scmp.eq.s32.totalorder %s29, 1
      %p167 = por %p165, %p166
      %p169 = scmp.ne.s32.totalorder %s154, %s168
      %p170 = scmp.eq.s32.totalorder %s29, 0
      %p171 = por %p169, %p170
      %s173 = sadd.s32 %s172, 1
      %p176 = scmp.eq.s32.totalorder %s23, 1
      %p177 = scmp.ne.s32.totalorder %s172, %s174
      %p178 = scmp.eq.s32.totalorder %s23, 0
      %p179 = por %p177, %p178
      %p180 = scmp.ne.s32.totalorder %s172, %s174
      %p181 = scmp.eq.s32.totalorder %s28, 1
      %p182 = por %p180, %p181
      %p183 = scmp.ne.s32.totalorder %s174, %s175
      %p184 = scmp.eq.s32.totalorder %s28, 0
      %p185 = por %p183, %p184
      %p186 = scmp.ne.s32.totalorder %s174, %s175
      %p187 = scmp.eq.s32.totalorder %s29, 1
      %p188 = por %p186, %p187
      %p190 = scmp.ne.s32.totalorder %s175, %s189
      %p191 = scmp.eq.s32.totalorder %s29, 0
      %p192 = por %p190, %p191
      %s194 = sadd.s32 %s193, 1
      %p197 = scmp.eq.s32.totalorder %s23, 1
      %p198 = scmp.ne.s32.totalorder %s193, %s195
      %p199 = scmp.eq.s32.totalorder %s23, 0
      %p200 = por %p198, %p199
      %p201 = scmp.ne.s32.totalorder %s193, %s195
      %p202 = scmp.eq.s32.totalorder %s28, 1
      %p203 = por %p201, %p202
      %p204 = scmp.ne.s32.totalorder %s195, %s196
      %p205 = scmp.eq.s32.totalorder %s28, 0
      %p206 = por %p204, %p205
      %p207 = scmp.ne.s32.totalorder %s195, %s196
      %p208 = scmp.eq.s32.totalorder %s29, 1
      %p209 = por %p207, %p208
      %p211 = scmp.ne.s32.totalorder %s196, %s210
      %p212 = scmp.eq.s32.totalorder %s29, 0
      %p213 = por %p211, %p212
      %s215 = sadd.s32 %s214, 1
      %p218 = scmp.eq.s32.totalorder %s23, 1
      %p219 = scmp.ne.s32.totalorder %s214, %s216
      %p220 = scmp.eq.s32.totalorder %s23, 0
      %p221 = por %p219, %p220
      %p222 = scmp.ne.s32.totalorder %s214, %s216
      %p223 = scmp.eq.s32.totalorder %s28, 1
      %p224 = por %p222, %p223
      %p225 = scmp.ne.s32.totalorder %s216, %s217
      %p226 = scmp.eq.s32.totalorder %s28, 0
      %p227 = por %p225, %p226
      %p228 = scmp.ne.s32.totalorder %s216, %s217
      %p229 = scmp.eq.s32.totalorder %s29, 1
      %p230 = por %p228, %p229
      %p232 = scmp.ne.s32.totalorder %s217, %s231
      %p233 = scmp.eq.s32.totalorder %s29, 0
      %p234 = por %p232, %p233
      %s236 = sadd.s32 %s235, 1
      %p239 = scmp.eq.s32.totalorder %s23, 1
      %p240 = scmp.ne.s32.totalorder %s235, %s237
      %p241 = scmp.eq.s32.totalorder %s23, 0
      %p242 = por %p240, %p241
      %p243 = scmp.ne.s32.totalorder %s235, %s237
      %p244 = scmp.eq.s32.totalorder %s28, 1
      %p245 = por %p243, %p244
      %p246 = scmp.ne.s32.totalorder %s237, %s238
      %p247 = scmp.eq.s32.totalorder %s28, 0
      %p248 = por %p246, %p247
      %p249 = scmp.ne.s32.totalorder %s237, %s238
      %p250 = scmp.eq.s32.totalorder %s29, 1
      %p251 = por %p249, %p250
      %p253 = scmp.ne.s32.totalorder %s238, %s252
      %p254 = scmp.eq.s32.totalorder %s29, 0
      %p255 = por %p253, %p254
      %s257 = sadd.s32 %s256, 1
      %p260 = scmp.eq.s32.totalorder %s23, 1
      %p261 = scmp.ne.s32.totalorder %s256, %s258
      %p262 = scmp.eq.s32.totalorder %s23, 0
      %p263 = por %p261, %p262
      %p264 = scmp.ne.s32.totalorder %s256, %s258
      %p265 = scmp.eq.s32.totalorder %s28, 1
      %p266 = por %p264, %p265
      %p267 = scmp.ne.s32.totalorder %s258, %s259
      %p268 = scmp.eq.s32.totalorder %s28, 0
      %p269 = por %p267, %p268
      %p270 = scmp.ne.s32.totalorder %s258, %s259
      %p271 = scmp.eq.s32.totalorder %s29, 1
      %p272 = por %p270, %p271
      %p274 = scmp.ne.s32.totalorder %s259, %s273
      %p275 = scmp.eq.s32.totalorder %s29, 0
      %p276 = por %p274, %p275
      %s278 = sadd.s32 %s277, 1
      %p281 = scmp.eq.s32.totalorder %s23, 1
      %p282 = scmp.ne.s32.totalorder %s277, %s279
      %p283 = scmp.eq.s32.totalorder %s23, 0
      %p284 = por %p282, %p283
      %p285 = scmp.ne.s32.totalorder %s277, %s279
      %p286 = scmp.eq.s32.totalorder %s28, 1
      %p287 = por %p285, %p286
      %p288 = scmp.ne.s32.totalorder %s279, %s280
      %p289 = scmp.eq.s32.totalorder %s28, 0
      %p290 = por %p288, %p289
      %p291 = scmp.ne.s32.totalorder %s279, %s280
      %p292 = scmp.eq.s32.totalorder %s29, 1
      %p293 = por %p291, %p292
      %p295 = scmp.ne.s32.totalorder %s280, %s294
      %p296 = scmp.eq.s32.totalorder %s29, 0
      %p297 = por %p295, %p296
      %s298 = ssub.s32 %s23, %s30
      %p299 = scmp.eq.s32.totalorder %s298, 0
      %s301 = sadd.s32 %s300, 1
      %s302 = scalar_select %p299, %s300, %s301
      %p305 = pneg %p299
      %p306 = scmp.eq.s32.totalorder %s23, 1
      %p307 = por %p305, %p306
      %p308 = scmp.ne.s32.totalorder %s300, %s303
      %p309 = scmp.eq.s32.totalorder %s23, 0
      %p310 = por %p308, %p309
      %p311 = scmp.ne.s32.totalorder %s300, %s303
      %p312 = scmp.eq.s32.totalorder %s28, 1
      %p313 = por %p311, %p312
      %p314 = scmp.ne.s32.totalorder %s303, %s304
      %p315 = scmp.eq.s32.totalorder %s28, 0
      %p316 = por %p314, %p315
      %p317 = scmp.ne.s32.totalorder %s303, %s304
      %p318 = scmp.eq.s32.totalorder %s29, 1
      %p319 = por %p317, %p318
      %p321 = scmp.ne.s32.totalorder %s304, %s320
      %p322 = scmp.eq.s32.totalorder %s29, 0
      %p323 = por %p321, %p322
      %p324 = scmp.le.s32.totalorder 1, %s23
      %p325 = scmp.lt.s32.totalorder %s23, 3
      %p326 = pnand %p324, %p325
      %p327 = pneg %p326
      // Predicated region
      $region9: #{tpu_custom_call.1} parent=5 // pred_check
        _
      $region10: #{tpu_custom_call.1} parent=5 // pred_check_branch
        %329 = sbr.rel (%p326) target = $region12
      $region11: #{tpu_custom_call.1} parent=5 // pred_region
        %s330 = ssub.s32 %s23, 1
        // Predicated region
        $region13: #{tpu_custom_call.1} parent=11 // pred_check
          %p331 = pneg %p122
        $region14: #{tpu_custom_call.1} parent=11 // pred_check_branch
          %333 = sbr.rel (%p331) target = $region16
        $region15: #{tpu_custom_call.1} parent=11 // pred_region
          %s335 = ssub.s32 128, 128
          %336 = vsyncadd [#allocation3], %s335
          %s337 = sshll.u32 [#allocation2], 4
          %s338 = int_to_ptr.vmem [resolvable:$true] %s337
          %343 = dma.hbm_to_vmem [thread:$0]  %s3, 128, %s338, [#allocation3], 64, 64, 4
        $region16: #{tpu_custom_call.1} parent=11 // pred_fallthru
          _
        // Predicated region
        $region17: #{tpu_custom_call.1} parent=11 // pred_check
          %p344 = pneg %p143
        $region18: #{tpu_custom_call.1} parent=11 // pred_check_branch
          %346 = sbr.rel (%p344) target = $region20
        $region19: #{tpu_custom_call.1} parent=11 // pred_region
          _
        $region20: #{tpu_custom_call.1} parent=11 // pred_fallthru
          _
        // Predicated region
        $region21: #{tpu_custom_call.1} parent=11 // pred_check
          %p347 = pneg %p164
        $region22: #{tpu_custom_call.1} parent=11 // pred_check_branch
          %349 = sbr.rel (%p347) target = $region24
        $region23: #{tpu_custom_call.1} parent=11 // pred_region
          %s351 = ssub.s32 128, 128
          %352 = vsyncadd [#allocation6], %s351
          %s353 = sshll.u32 [#allocation5], 4
          %s354 = int_to_ptr.vmem [resolvable:$true] %s353
          %359 = dma.hbm_to_vmem [thread:$0]  %s5, 128, %s354, [#allocation6], 64, 64, 4
        $region24: #{tpu_custom_call.1} parent=11 // pred_fallthru
          _
        // Predicated region
        $region25: #{tpu_custom_call.1} parent=11 // pred_check
          %p360 = pneg %p185
        $region26: #{tpu_custom_call.1} parent=11 // pred_check_branch
          %362 = sbr.rel (%p360) target = $region28
        $region27: #{tpu_custom_call.1} parent=11 // pred_region
          _
        $region28: #{tpu_custom_call.1} parent=11 // pred_fallthru
          _
        // Predicated region
        $region29: #{tpu_custom_call.1} parent=11 // pred_check
          %p363 = pneg %p206
        $region30: #{tpu_custom_call.1} parent=11 // pred_check_branch
          %365 = sbr.rel (%p363) target = $region32
        $region31: #{tpu_custom_call.1} parent=11 // pred_region
          _
        $region32: #{tpu_custom_call.1} parent=11 // pred_fallthru
          _
        // Predicated region
        $region33: #{tpu_custom_call.1} parent=11 // pred_check
          %p366 = pneg %p227
        $region34: #{tpu_custom_call.1} parent=11 // pred_check_branch
          %368 = sbr.rel (%p366) target = $region36
        $region35: #{tpu_custom_call.1} parent=11 // pred_region
          _
        $region36: #{tpu_custom_call.1} parent=11 // pred_fallthru
          _
        // Predicated region
        $region37: #{tpu_custom_call.1} parent=11 // pred_check
          %p369 = pneg %p248
        $region38: #{tpu_custom_call.1} parent=11 // pred_check_branch
          %371 = sbr.rel (%p369) target = $region40
        $region39: #{tpu_custom_call.1} parent=11 // pred_region
          _
        $region40: #{tpu_custom_call.1} parent=11 // pred_fallthru
          _
        // Predicated region
        $region41: #{tpu_custom_call.1} parent=11 // pred_check
          %p372 = pneg %p269
        $region42: #{tpu_custom_call.1} parent=11 // pred_check_branch
          %374 = sbr.rel (%p372) target = $region44
        $region43: #{tpu_custom_call.1} parent=11 // pred_region
          _
        $region44: #{tpu_custom_call.1} parent=11 // pred_fallthru
          _
        // Predicated region
        $region45: #{tpu_custom_call.1} parent=11 // pred_check
          %p375 = pneg %p290
        $region46: #{tpu_custom_call.1} parent=11 // pred_check_branch
          %377 = sbr.rel (%p375) target = $region48
        $region47: #{tpu_custom_call.1} parent=11 // pred_region
          _
        $region48: #{tpu_custom_call.1} parent=11 // pred_fallthru
          _
      $region12: #{tpu_custom_call.1} parent=5 // pred_fallthru
        _
      %p378 = scmp.lt.s32.totalorder %s23, 2
      // Predicated region
      $region49: #{tpu_custom_call.1} parent=5 // pred_check
        %p379 = pneg %p378
      $region50: #{tpu_custom_call.1} parent=5 // pred_check_branch
        %381 = sbr.rel (%p379) target = $region52
      $region51: #{tpu_custom_call.1} parent=5 // pred_region
        // Predicated region
        $region53: #{tpu_custom_call.1} parent=51 // pred_check
          %p382 = pneg %p43
        $region54: #{tpu_custom_call.1} parent=51 // pred_check_branch
          %384 = sbr.rel (%p382) target = $region56
        $region55: #{tpu_custom_call.1} parent=51 // pred_region
          %s385 = smul.u32 8, %s23
          %p386 = scmp.lt.s32.totalorder %s385, 15
          %s387 = scalar_select %p386, %s385, 15
          %s388 = smul.addr %s387, 4
          %s389 = scalar_lea.vmem %s0, %s388
          %s390 = smul.u32 8, %s23
        $region56: #{tpu_custom_call.1} parent=51 // pred_fallthru
          _
        // Predicated region
        $region57: #{tpu_custom_call.1} parent=51 // pred_check
          %p391 = pneg %p69
        $region58: #{tpu_custom_call.1} parent=51 // pred_check_branch
          %393 = sbr.rel (%p391) target = $region60
        $region59: #{tpu_custom_call.1} parent=51 // pred_region
          %p394 = scmp.lt.s32.totalorder %s23, 1
          %s395 = scalar_select %p394, %s23, 1
          %s396 = smul.addr %s395, 8
          %s397 = smul.addr %s396, 4
          %s398 = scalar_lea.vmem %s1, %s397
        $region60: #{tpu_custom_call.1} parent=51 // pred_fallthru
          _
        // Predicated region
        $region61: #{tpu_custom_call.1} parent=51 // pred_check
          %p399 = pneg %p95
        $region62: #{tpu_custom_call.1} parent=51 // pred_check_branch
          %401 = sbr.rel (%p399) target = $region64
        $region63: #{tpu_custom_call.1} parent=51 // pred_region
          %p402 = scmp.lt.s32.totalorder %s23, 1
          %s403 = scalar_select %p402, %s23, 1
          %s404 = smul.addr %s403, 8
          %s405 = scalar_lea.vmem %s2, %s404
        $region64: #{tpu_custom_call.1} parent=51 // pred_fallthru
          _
      $region52: #{tpu_custom_call.1} parent=5 // pred_fallthru
        _
      %p406 = scmp.le.s32.totalorder 1, %s23
      %p407 = scmp.lt.s32.totalorder %s23, 3
      %p408 = pnand %p406, %p407
      %p409 = pneg %p408
      // Predicated region
      $region65: #{tpu_custom_call.1} parent=5 // pred_check
        _
      $region66: #{tpu_custom_call.1} parent=5 // pred_check_branch
        %411 = sbr.rel (%p408) target = $region68
      $region67: #{tpu_custom_call.1} parent=5 // pred_region
        %s412 = ssub.s32 %s23, 1
        // Predicated region
        $region69: #{tpu_custom_call.1} parent=67 // pred_check
          %p413 = pneg %p122
        $region70: #{tpu_custom_call.1} parent=67 // pred_check_branch
          %415 = sbr.rel (%p413) target = $region72
        $region71: #{tpu_custom_call.1} parent=67 // pred_region
          %416 = dma.done [#allocation3], 128
        $region72: #{tpu_custom_call.1} parent=67 // pred_fallthru
          _
        // Predicated region
        $region73: #{tpu_custom_call.1} parent=67 // pred_check
          %p417 = pneg %p164
        $region74: #{tpu_custom_call.1} parent=67 // pred_check_branch
          %419 = sbr.rel (%p417) target = $region76
        $region75: #{tpu_custom_call.1} parent=67 // pred_region
          %420 = dma.done [#allocation6], 128
        $region76: #{tpu_custom_call.1} parent=67 // pred_fallthru
          _
        %s421 = smul.u32 8, %s28
        %p422 = scmp.lt.s32.totalorder %s421, 15
        %s423 = scalar_select %p422, %s421, 15
        %s424 = smul.addr %s423, 4
        %s425 = scalar_lea.vmem %s0, %s424
        %p426 = pneg %p49
        %p427 = pneg %p46
        %p428 = scmp.lt.s32.totalorder %s28, 1
        %s429 = scalar_select %p428, %s28, 1
        %s430 = smul.addr %s429, 8
        %s431 = smul.addr %s430, 4
        %s432 = scalar_lea.vmem %s1, %s431
        %p433 = pneg %p75
        %p434 = pneg %p72
        %p435 = scmp.lt.s32.totalorder %s28, 1
        %s436 = scalar_select %p435, %s28, 1
        %s437 = smul.addr %s436, 8
        %s438 = scalar_lea.vmem %s2, %s437
        %p439 = pneg %p101
        %p440 = pneg %p98
        %p441 = pneg %p122
        %p442 = pneg %p119
        %p443 = pneg %p143
        %p444 = pneg %p140
        %p445 = pneg %p164
        %p446 = pneg %p161
        %p447 = pneg %p185
        %p448 = pneg %p182
        %p449 = pneg %p206
        %p450 = pneg %p203
        %p451 = pneg %p227
        %p452 = pneg %p224
        %p453 = pneg %p248
        %p454 = pneg %p245
        %p455 = pneg %p269
        %p456 = pneg %p266
        %p457 = pneg %p290
        %p458 = pneg %p287
        %p459 = pneg %p316
        %p460 = pneg %p313
        %s461 = sand.u32 %s303, 1
        %s462 = scalar_lea.sflag [#allocation4], %s461
        %s463 = sand.u32 %s303, 1
        %s464 = smul.addr %s463, 8
        %s465 = scalar_lea.vmem [#allocation7], %s464
        %s466 = smul.u32 8, %s28
        %p467 = scmp.lt.s32.totalorder %s466, 15
        %s468 = scalar_select %p467, %s466, 15
        %s469 = smul.addr %s468, 4
        %s470 = scalar_lea.vmem %s0, %s469
        %s471 = smul.u32 8, %s28
        %p472 = scmp.lt.s32.totalorder %s28, 1
        %s473 = scalar_select %p472, %s28, 1
        %s474 = smul.addr %s473, 8
        %s475 = smul.addr %s474, 4
        %s476 = scalar_lea.vmem %s1, %s475
        %p477 = scmp.lt.s32.totalorder %s28, 1
        %s478 = scalar_select %p477, %s28, 1
        %s479 = smul.addr %s478, 8
        %s480 = scalar_lea.vmem %s2, %s479
        %v482 = vld [vmem:[%s470] sm:$0xf]
        %v483 = vld [vmem:[%s470 + $0x4] sm:$0xf]
        %v484 = vld [vmem:[%s470 + $0x8] sm:$0xf]
        %v485 = vld [vmem:[%s470 + $0xc] sm:$0xf]
        %v486 = vld [vmem:[%s470 + $0x10] sm:$0xf]
        %v487 = vld [vmem:[%s470 + $0x14] sm:$0xf]
        %v488 = vld [vmem:[%s470 + $0x18] sm:$0xf]
        %v489 = vld [vmem:[%s470 + $0x1c] sm:$0xf]
        %v490 = vld [vmem:[%s476] sm:$0xf]
        %v491 = vld [vmem:[%s476 + $0x4] sm:$0xf]
        %v492 = vld [vmem:[%s476 + $0x8] sm:$0xf]
        %v493 = vld [vmem:[%s476 + $0xc] sm:$0xf]
        %v494 = vld [vmem:[%s476 + $0x10] sm:$0xf]
        %v495 = vld [vmem:[%s476 + $0x14] sm:$0xf]
        %v496 = vld [vmem:[%s476 + $0x18] sm:$0xf]
        %v497 = vld [vmem:[%s476 + $0x1c] sm:$0xf]
        %v498 = vld [vmem:[%s480] sm:$0xff]
        %v499 = vld [vmem:[#allocation2] sm:$0xf]
        %v500 = vld [vmem:[#allocation2 + $0x4] sm:$0xf]
        %v501 = vld [vmem:[%s4] sm:$0xf]
        %v502 = vld [vmem:[%s4 + $0x4] sm:$0xf]
        %v503 = vld [vmem:[%s4 + $0x8] sm:$0xf]
        %v504 = vld [vmem:[%s4 + $0xc] sm:$0xf]
        %v505 = vld [vmem:[#allocation5] sm:$0xf]
        %v506 = vld [vmem:[#allocation5 + $0x4] sm:$0xf]
        %v507 = vld [vmem:[%s6] sm:$0xf]
        %v508 = vld [vmem:[%s6 + $0x4] sm:$0xf]
        %v509 = vld [vmem:[%s6 + $0x8] sm:$0xf]
        %v510 = vld [vmem:[%s6 + $0xc] sm:$0xf]
        %v511 = vld [vmem:[%s7] sm:$0x1]
        %v512 = vld [vmem:[%s8] sm:$0xf]
        %v513 = vld [vmem:[%s8 + $0x4] sm:$0xf]
        %v514 = vld [vmem:[%s8 + $0x8] sm:$0xf]
        %v515 = vld [vmem:[%s8 + $0xc] sm:$0xf]
        %v516 = vld [vmem:[%s9] sm:$0x1]
        %v517 = vld [vmem:[%s10] sm:$0xf]
        %v518 = vld [vmem:[%s10 + $0x4] sm:$0xf]
        %v519 = vld [vmem:[%s10 + $0x8] sm:$0xf]
        %v520 = vld [vmem:[%s10 + $0xc] sm:$0xf]
        %v521 = vld [vmem:[%s11] sm:$0x1]
        %v530 = vunpack.c.l.b16 %v482
        %v531 = vunpack.c.l.b16 %v483
        %v532 = vunpack.c.l.b16 %v484
        %v533 = vunpack.c.l.b16 %v485
        %v534 = vunpack.c.l.b16 %v486
        %v535 = vunpack.c.l.b16 %v487
        %v536 = vunpack.c.l.b16 %v488
        %v537 = vunpack.c.l.b16 %v489
        %v538 = vpack.c.b16 %v531, %v530
        %v539 = vpack.c.b16 %v533, %v532
        %v540 = vpack.c.b16 %v535, %v534
        %v541 = vpack.c.b16 %v537, %v536
        %v544 = vunpack.c.l.b16 %v499
        %v545 = vunpack.c.l.b16 %v500
        %v546 = vpack.c.b16 %v545, %v544
        %vm548 = vcmask 130048
        %v550 = vsel %vm548, %v538, 0
        %v553 = vsel %vm548, %v539, 0
        %v556 = vsel %vm548, %v540, 0
        %v559 = vsel %vm548, %v541, 0
        %561 = vmatprep.subr.bf16.mxu0 0
        %562 = vmatpush1.bf16.msra.mxu0 %v546
        %563 = vmatprep.subr.bf16.mxu0 0
        %564 = vmatpush1.bf16.msra.mxu0 0
        %565 = vmatprep.subr.bf16.mxu0 0
        %566 = vmatpush1.bf16.msra.mxu0 0
        %567 = vmatprep.subr.bf16.mxu0 0
        %568 = vmatpush1.bf16.msra.mxu0 0
        %569 = vmatprep.subr.bf16.mxu0 0
        %570 = vmatpush1.bf16.msra.mxu0 0
        %571 = vmatprep.subr.bf16.mxu0 0
        %572 = vmatpush1.bf16.msra.mxu0 0
        %573 = vmatprep.subr.bf16.mxu0 0
        %574 = vmatpush1.bf16.msra.mxu0 0
        %575 = vmatprep.subr.bf16.mxu0 0
        %576 = vmatpush1.bf16.msra.mxu0 0
        %577 = vmatprep.subr.bf16.mxu0 0
        %578 = vmatpush1.bf16.msra.mxu0 0
        %579 = vmatprep.subr.bf16.mxu0 0
        %580 = vmatpush1.bf16.msra.mxu0 0
        %581 = vmatprep.subr.bf16.mxu0 0
        %582 = vmatpush1.bf16.msra.mxu0 0
        %583 = vmatprep.subr.bf16.mxu0 0
        %584 = vmatpush1.bf16.msra.mxu0 0
        %585 = vmatprep.subr.bf16.mxu0 0
        %586 = vmatpush1.bf16.msra.mxu0 0
        %587 = vmatprep.subr.bf16.mxu0 0
        %588 = vmatpush1.bf16.msra.mxu0 0
        %589 = vmatprep.subr.bf16.mxu0 0
        %590 = vmatpush1.bf16.msra.mxu0 0
        %591 = vmatprep.subr.bf16.mxu0 0
        %592 = vmatpush1.bf16.msra.mxu0 0
        %593 = vmatprep.mubr.bf16.mxu0 0
        %594 = vmatmul.mubr.bf16.gmra.mrb[0].mxu0 %v550
        %v595 = vpop.f32.mrb[0].mxu0
        %v596 = vadd.f32 0.0, %v595
        %v597 = vpop.f32.mrb[0].mxu0
        %v598 = vpop.f32.mrb[0].mxu0
        %v599 = vadd.f32 0.0, %v598
        %v600 = vpop.f32.mrb[0].mxu0
        %601 = vmatprep.mubr.bf16.mxu0 0
        %602 = vmatmul.mubr.bf16.gmra.mrb[0].mxu0 %v553
        %v603 = vpop.f32.mrb[0].mxu0
        %v604 = vadd.f32 0.0, %v603
        %v605 = vpop.f32.mrb[0].mxu0
        %v606 = vpop.f32.mrb[0].mxu0
        %v607 = vadd.f32 0.0, %v606
        %v608 = vpop.f32.mrb[0].mxu0
        %609 = vmatprep.mubr.bf16.mxu0 0
        %610 = vmatmul.mubr.bf16.gmra.mrb[0].mxu0 %v556
        %v611 = vpop.f32.mrb[0].mxu0
        %v612 = vadd.f32 0.0, %v611
        %v613 = vpop.f32.mrb[0].mxu0
        %v614 = vpop.f32.mrb[0].mxu0
        %v615 = vadd.f32 0.0, %v614
        %v616 = vpop.f32.mrb[0].mxu0
        %617 = vmatprep.mubr.bf16.mxu0 0
        %618 = vmatmul.mubr.bf16.gmra.mrb[0].mxu0 %v559
        %v619 = vpop.f32.mrb[0].mxu0
        %v620 = vadd.f32 0.0, %v619
        %v621 = vpop.f32.mrb[0].mxu0
        %v622 = vpop.f32.mrb[0].mxu0
        %v623 = vadd.f32 0.0, %v622
        %v624 = vpop.f32.mrb[0].mxu0
        %625 = vdwg.mxu0
        %v626 = vmax.f32 %v596, 0.0
        %v627 = vmax.f32 %v599, 0.0
        %v628 = vmax.f32 %v604, 0.0
        %v629 = vmax.f32 %v607, 0.0
        %v630 = vmax.f32 %v612, 0.0
        %v631 = vmax.f32 %v615, 0.0
        %v632 = vmax.f32 %v620, 0.0
        %v633 = vmax.f32 %v623, 0.0
        %v634 = vpack.c.bf16 %v627, %v626
        %v635 = vpack.c.bf16 %v629, %v628
        %v636 = vpack.c.bf16 %v631, %v630
        %v637 = vpack.c.bf16 %v633, %v632
        %v646 = vunpack.c.l.b16 %v490
        %v647 = vunpack.c.l.b16 %v491
        %v648 = vunpack.c.l.b16 %v492
        %v649 = vunpack.c.l.b16 %v493
        %v650 = vunpack.c.l.b16 %v494
        %v651 = vunpack.c.l.b16 %v495
        %v652 = vunpack.c.l.b16 %v496
        %v653 = vunpack.c.l.b16 %v497
        %v654 = vpack.c.b16 %v647, %v646
        %v655 = vpack.c.b16 %v649, %v648
        %v656 = vpack.c.b16 %v651, %v650
        %v657 = vpack.c.b16 %v653, %v652
        %vm658 = vcmask 523264
        %v660 = vsel %vm658, %v654, 0
        %v663 = vsel %vm658, %v655, 0
        %v666 = vsel %vm658, %v656, 0
        %v669 = vsel %vm658, %v657, 0
        %671 = vmatprep.subr.bf16.mxu0 0
        %672 = vmatpush1.bf16.msra.mxu0 %v634
        %673 = vmatprep.subr.bf16.mxu0 0
        %674 = vmatpush1.bf16.msra.mxu0 %v635
        %675 = vmatprep.subr.bf16.mxu0 0
        %676 = vmatpush1.bf16.msra.mxu0 %v636
        %677 = vmatprep.subr.bf16.mxu0 0
        %678 = vmatpush1.bf16.msra.mxu0 %v637
        %679 = vmatprep.subr.bf16.mxu0 0
        %680 = vmatpush1.bf16.msra.mxu0 0
        %681 = vmatprep.subr.bf16.mxu0 0
        %682 = vmatpush1.bf16.msra.mxu0 0
        %683 = vmatprep.subr.bf16.mxu0 0
        %684 = vmatpush1.bf16.msra.mxu0 0
        %685 = vmatprep.subr.bf16.mxu0 0
        %686 = vmatpush1.bf16.msra.mxu0 0
        %687 = vmatprep.subr.bf16.mxu0 0
        %688 = vmatpush1.bf16.msra.mxu0 0
        %689 = vmatprep.subr.bf16.mxu0 0
        %690 = vmatpush1.bf16.msra.mxu0 0
        %691 = vmatprep.subr.bf16.mxu0 0
        %692 = vmatpush1.bf16.msra.mxu0 0
        %693 = vmatprep.subr.bf16.mxu0 0
        %694 = vmatpush1.bf16.msra.mxu0 0
        %695 = vmatprep.subr.bf16.mxu0 0
        %696 = vmatpush1.bf16.msra.mxu0 0
        %697 = vmatprep.subr.bf16.mxu0 0
        %698 = vmatpush1.bf16.msra.mxu0 0
        %699 = vmatprep.subr.bf16.mxu0 0
        %700 = vmatpush1.bf16.msra.mxu0 0
        %701 = vmatprep.subr.bf16.mxu0 0
        %702 = vmatpush1.bf16.msra.mxu0 0
        %703 = vmatprep.mubr.bf16.mxu0 0
        %704 = vmatmul.mubr.bf16.gmra.mrb[0].mxu0 %v660
        %v705 = vpop.f32.mrb[0].mxu0
        %v706 = vadd.f32 0.0, %v705
        %v707 = vpop.f32.mrb[0].mxu0
        %v708 = vpop.f32.mrb[0].mxu0
        %v709 = vadd.f32 0.0, %v708
        %v710 = vpop.f32.mrb[0].mxu0
        %711 = vmatprep.mubr.bf16.mxu0 0
        %712 = vmatmul.mubr.bf16.gmra.mrb[0].mxu0 %v663
        %v713 = vpop.f32.mrb[0].mxu0
        %v714 = vadd.f32 0.0, %v713
        %v715 = vpop.f32.mrb[0].mxu0
        %v716 = vpop.f32.mrb[0].mxu0
        %v717 = vadd.f32 0.0, %v716
        %v718 = vpop.f32.mrb[0].mxu0
        %719 = vmatprep.mubr.bf16.mxu0 0
        %720 = vmatmul.mubr.bf16.gmra.mrb[0].mxu0 %v666
        %v721 = vpop.f32.mrb[0].mxu0
        %v722 = vadd.f32 0.0, %v721
        %v723 = vpop.f32.mrb[0].mxu0
        %v724 = vpop.f32.mrb[0].mxu0
        %v725 = vadd.f32 0.0, %v724
        %v726 = vpop.f32.mrb[0].mxu0
        %727 = vmatprep.mubr.bf16.mxu0 0
        %728 = vmatmul.mubr.bf16.gmra.mrb[0].mxu0 %v669
        %v729 = vpop.f32.mrb[0].mxu0
        %v730 = vadd.f32 0.0, %v729
        %v731 = vpop.f32.mrb[0].mxu0
        %v732 = vpop.f32.mrb[0].mxu0
        %v733 = vadd.f32 0.0, %v732
        %v734 = vpop.f32.mrb[0].mxu0
        %735 = vdwg.mxu0
        %v736 = vpack.c.bf16 %v709, %v706
        %v737 = vpack.c.bf16 %v717, %v714
        %v738 = vpack.c.bf16 %v725, %v722
        %v739 = vpack.c.bf16 %v733, %v730
        %v744 = vunpack.c.l.b16 %v501
        %v745 = vunpack.c.l.b16 %v502
        %v746 = vunpack.c.l.b16 %v503
        %v747 = vunpack.c.l.b16 %v504
        %v748 = vpack.c.b16 %v745, %v744
        %v749 = vpack.c.b16 %v747, %v746
        %vm752 = vcmask 261120
        %v754 = vsel %vm752, %v736, 0
        %v757 = vsel %vm752, %v737, 0
        %v760 = vsel %vm752, %v738, 0
        %v763 = vsel %vm752, %v739, 0
        %765 = vmatprep.subr.bf16.mxu0 0
        %766 = vmatpush1.bf16.msra.mxu0 %v748
        %767 = vmatprep.subr.bf16.mxu0 0
        %768 = vmatpush1.bf16.msra.mxu0 %v749
        %769 = vmatprep.subr.bf16.mxu0 0
        %770 = vmatpush1.bf16.msra.mxu0 0
        %771 = vmatprep.subr.bf16.mxu0 0
        %772 = vmatpush1.bf16.msra.mxu0 0
        %773 = vmatprep.subr.bf16.mxu0 0
        %774 = vmatpush1.bf16.msra.mxu0 0
        %775 = vmatprep.subr.bf16.mxu0 0
        %776 = vmatpush1.bf16.msra.mxu0 0
        %777 = vmatprep.subr.bf16.mxu0 0
        %778 = vmatpush1.bf16.msra.mxu0 0
        %779 = vmatprep.subr.bf16.mxu0 0
        %780 = vmatpush1.bf16.msra.mxu0 0
        %781 = vmatprep.subr.bf16.mxu0 0
        %782 = vmatpush1.bf16.msra.mxu0 0
        %783 = vmatprep.subr.bf16.mxu0 0
        %784 = vmatpush1.bf16.msra.mxu0 0
        %785 = vmatprep.subr.bf16.mxu0 0
        %786 = vmatpush1.bf16.msra.mxu0 0
        %787 = vmatprep.subr.bf16.mxu0 0
        %788 = vmatpush1.bf16.msra.mxu0 0
        %789 = vmatprep.subr.bf16.mxu0 0
        %790 = vmatpush1.bf16.msra.mxu0 0
        %791 = vmatprep.subr.bf16.mxu0 0
        %792 = vmatpush1.bf16.msra.mxu0 0
        %793 = vmatprep.subr.bf16.mxu0 0
        %794 = vmatpush1.bf16.msra.mxu0 0
        %795 = vmatprep.subr.bf16.mxu0 0
        %796 = vmatpush1.bf16.msra.mxu0 0
        %797 = vmatprep.mubr.bf16.mxu0 0
        %798 = vmatmul.mubr.bf16.gmra.mrb[0].mxu0 %v754
        %v799 = vpop.f32.mrb[0].mxu0
        %v800 = vadd.f32 0.0, %v799
        %v801 = vpop.f32.mrb[0].mxu0
        %v802 = vpop.f32.mrb[0].mxu0
        %v803 = vadd.f32 0.0, %v802
        %v804 = vpop.f32.mrb[0].mxu0
        %805 = vmatprep.mubr.bf16.mxu0 0
        %806 = vmatmul.mubr.bf16.gmra.mrb[0].mxu0 %v757
        %v807 = vpop.f32.mrb[0].mxu0
        %v808 = vadd.f32 0.0, %v807
        %v809 = vpop.f32.mrb[0].mxu0
        %v810 = vpop.f32.mrb[0].mxu0
        %v811 = vadd.f32 0.0, %v810
        %v812 = vpop.f32.mrb[0].mxu0
        %813 = vmatprep.mubr.bf16.mxu0 0
        %814 = vmatmul.mubr.bf16.gmra.mrb[0].mxu0 %v760
        %v815 = vpop.f32.mrb[0].mxu0
        %v816 = vadd.f32 0.0, %v815
        %v817 = vpop.f32.mrb[0].mxu0
        %v818 = vpop.f32.mrb[0].mxu0
        %v819 = vadd.f32 0.0, %v818
        %v820 = vpop.f32.mrb[0].mxu0
        %821 = vmatprep.mubr.bf16.mxu0 0
        %822 = vmatmul.mubr.bf16.gmra.mrb[0].mxu0 %v763
        %v823 = vpop.f32.mrb[0].mxu0
        %v824 = vadd.f32 0.0, %v823
        %v825 = vpop.f32.mrb[0].mxu0
        %v826 = vpop.f32.mrb[0].mxu0
        %v827 = vadd.f32 0.0, %v826
        %v828 = vpop.f32.mrb[0].mxu0
        %829 = vdwg.mxu0
        %v830 = vadd.f32 %v596, %v800
        %v831 = vadd.f32 %v599, %v803
        %v832 = vadd.f32 %v604, %v808
        %v833 = vadd.f32 %v607, %v811
        %v834 = vadd.f32 %v612, %v816
        %v835 = vadd.f32 %v615, %v819
        %v836 = vadd.f32 %v620, %v824
        %v837 = vadd.f32 %v623, %v827
        %v838 = vmax.f32 %v830, 0.0
        %v839 = vmax.f32 %v831, 0.0
        %v840 = vmax.f32 %v832, 0.0
        %v841 = vmax.f32 %v833, 0.0
        %v842 = vmax.f32 %v834, 0.0
        %v843 = vmax.f32 %v835, 0.0
        %v844 = vmax.f32 %v836, 0.0
        %v845 = vmax.f32 %v837, 0.0
        %v846 = vpack.c.bf16 %v839, %v838
        %v847 = vpack.c.bf16 %v841, %v840
        %v848 = vpack.c.bf16 %v843, %v842
        %v849 = vpack.c.bf16 %v845, %v844
        %850 = vmatprep.subr.bf16.mxu0 0
        %851 = vmatpush1.bf16.msra.mxu0 %v846
        %852 = vmatprep.subr.bf16.mxu0 0
        %853 = vmatpush1.bf16.msra.mxu0 %v847
        %854 = vmatprep.subr.bf16.mxu0 0
        %855 = vmatpush1.bf16.msra.mxu0 %v848
        %856 = vmatprep.subr.bf16.mxu0 0
        %857 = vmatpush1.bf16.msra.mxu0 %v849
        %858 = vmatprep.subr.bf16.mxu0 0
        %859 = vmatpush1.bf16.msra.mxu0 0
        %860 = vmatprep.subr.bf16.mxu0 0
        %861 = vmatpush1.bf16.msra.mxu0 0
        %862 = vmatprep.subr.bf16.mxu0 0
        %863 = vmatpush1.bf16.msra.mxu0 0
        %864 = vmatprep.subr.bf16.mxu0 0
        %865 = vmatpush1.bf16.msra.mxu0 0
        %866 = vmatprep.subr.bf16.mxu0 0
        %867 = vmatpush1.bf16.msra.mxu0 0
        %868 = vmatprep.subr.bf16.mxu0 0
        %869 = vmatpush1.bf16.msra.mxu0 0
        %870 = vmatprep.subr.bf16.mxu0 0
        %871 = vmatpush1.bf16.msra.mxu0 0
        %872 = vmatprep.subr.bf16.mxu0 0
        %873 = vmatpush1.bf16.msra.mxu0 0
        %874 = vmatprep.subr.bf16.mxu0 0
        %875 = vmatpush1.bf16.msra.mxu0 0
        %876 = vmatprep.subr.bf16.mxu0 0
        %877 = vmatpush1.bf16.msra.mxu0 0
        %878 = vmatprep.subr.bf16.mxu0 0
        %879 = vmatpush1.bf16.msra.mxu0 0
        %880 = vmatprep.subr.bf16.mxu0 0
        %881 = vmatpush1.bf16.msra.mxu0 0
        %882 = vmatprep.mubr.bf16.mxu0 0
        %883 = vmatmul.mubr.bf16.gmra.mrb[0].mxu0 %v660
        %v884 = vpop.f32.mrb[0].mxu0
        %v885 = vadd.f32 0.0, %v884
        %v886 = vpop.f32.mrb[0].mxu0
        %v887 = vpop.f32.mrb[0].mxu0
        %v888 = vadd.f32 0.0, %v887
        %v889 = vpop.f32.mrb[0].mxu0
        %890 = vmatprep.mubr.bf16.mxu0 0
        %891 = vmatmul.mubr.bf16.gmra.mrb[0].mxu0 %v663
        %v892 = vpop.f32.mrb[0].mxu0
        %v893 = vadd.f32 0.0, %v892
        %v894 = vpop.f32.mrb[0].mxu0
        %v895 = vpop.f32.mrb[0].mxu0
        %v896 = vadd.f32 0.0, %v895
        %v897 = vpop.f32.mrb[0].mxu0
        %898 = vmatprep.mubr.bf16.mxu0 0
        %899 = vmatmul.mubr.bf16.gmra.mrb[0].mxu0 %v666
        %v900 = vpop.f32.mrb[0].mxu0
        %v901 = vadd.f32 0.0, %v900
        %v902 = vpop.f32.mrb[0].mxu0
        %v903 = vpop.f32.mrb[0].mxu0
        %v904 = vadd.f32 0.0, %v903
        %v905 = vpop.f32.mrb[0].mxu0
        %906 = vmatprep.mubr.bf16.mxu0 0
        %907 = vmatmul.mubr.bf16.gmra.mrb[0].mxu0 %v669
        %v908 = vpop.f32.mrb[0].mxu0
        %v909 = vadd.f32 0.0, %v908
        %v910 = vpop.f32.mrb[0].mxu0
        %v911 = vpop.f32.mrb[0].mxu0
        %v912 = vadd.f32 0.0, %v911
        %v913 = vpop.f32.mrb[0].mxu0
        %914 = vdwg.mxu0
        %v915 = vpack.c.bf16 %v888, %v885
        %v916 = vpack.c.bf16 %v896, %v893
        %v917 = vpack.c.bf16 %v904, %v901
        %v918 = vpack.c.bf16 %v912, %v909
        %v920 = vsel %vm752, %v915, 0
        %v923 = vsel %vm752, %v916, 0
        %v926 = vsel %vm752, %v917, 0
        %v929 = vsel %vm752, %v918, 0
        %931 = vmatprep.subr.bf16.mxu0 0
        %932 = vmatpush1.bf16.msra.mxu0 %v748
        %933 = vmatprep.subr.bf16.mxu0 0
        %934 = vmatpush1.bf16.msra.mxu0 %v749
        %935 = vmatprep.subr.bf16.mxu0 0
        %936 = vmatpush1.bf16.msra.mxu0 0
        %937 = vmatprep.subr.bf16.mxu0 0
        %938 = vmatpush1.bf16.msra.mxu0 0
        %939 = vmatprep.subr.bf16.mxu0 0
        %940 = vmatpush1.bf16.msra.mxu0 0
        %941 = vmatprep.subr.bf16.mxu0 0
        %942 = vmatpush1.bf16.msra.mxu0 0
        %943 = vmatprep.subr.bf16.mxu0 0
        %944 = vmatpush1.bf16.msra.mxu0 0
        %945 = vmatprep.subr.bf16.mxu0 0
        %946 = vmatpush1.bf16.msra.mxu0 0
        %947 = vmatprep.subr.bf16.mxu0 0
        %948 = vmatpush1.bf16.msra.mxu0 0
        %949 = vmatprep.subr.bf16.mxu0 0
        %950 = vmatpush1.bf16.msra.mxu0 0
        %951 = vmatprep.subr.bf16.mxu0 0
        %952 = vmatpush1.bf16.msra.mxu0 0
        %953 = vmatprep.subr.bf16.mxu0 0
        %954 = vmatpush1.bf16.msra.mxu0 0
        %955 = vmatprep.subr.bf16.mxu0 0
        %956 = vmatpush1.bf16.msra.mxu0 0
        %957 = vmatprep.subr.bf16.mxu0 0
        %958 = vmatpush1.bf16.msra.mxu0 0
        %959 = vmatprep.subr.bf16.mxu0 0
        %960 = vmatpush1.bf16.msra.mxu0 0
        %961 = vmatprep.subr.bf16.mxu0 0
        %962 = vmatpush1.bf16.msra.mxu0 0
        %963 = vmatprep.mubr.bf16.mxu0 0
        %964 = vmatmul.mubr.bf16.gmra.mrb[0].mxu0 %v920
        %v965 = vpop.f32.mrb[0].mxu0
        %v966 = vadd.f32 0.0, %v965
        %v967 = vpop.f32.mrb[0].mxu0
        %v968 = vpop.f32.mrb[0].mxu0
        %v969 = vadd.f32 0.0, %v968
        %v970 = vpop.f32.mrb[0].mxu0
        %971 = vmatprep.mubr.bf16.mxu0 0
        %972 = vmatmul.mubr.bf16.gmra.mrb[0].mxu0 %v923
        %v973 = vpop.f32.mrb[0].mxu0
        %v974 = vadd.f32 0.0, %v973
        %v975 = vpop.f32.mrb[0].mxu0
        %v976 = vpop.f32.mrb[0].mxu0
        %v977 = vadd.f32 0.0, %v976
        %v978 = vpop.f32.mrb[0].mxu0
        %979 = vmatprep.mubr.bf16.mxu0 0
        %980 = vmatmul.mubr.bf16.gmra.mrb[0].mxu0 %v926
        %v981 = vpop.f32.mrb[0].mxu0
        %v982 = vadd.f32 0.0, %v981
        %v983 = vpop.f32.mrb[0].mxu0
        %v984 = vpop.f32.mrb[0].mxu0
        %v985 = vadd.f32 0.0, %v984
        %v986 = vpop.f32.mrb[0].mxu0
        %987 = vmatprep.mubr.bf16.mxu0 0
        %988 = vmatmul.mubr.bf16.gmra.mrb[0].mxu0 %v929
        %v989 = vpop.f32.mrb[0].mxu0
        %v990 = vadd.f32 0.0, %v989
        %v991 = vpop.f32.mrb[0].mxu0
        %v992 = vpop.f32.mrb[0].mxu0
        %v993 = vadd.f32 0.0, %v992
        %v994 = vpop.f32.mrb[0].mxu0
        %995 = vdwg.mxu0
        %v996 = vadd.f32 %v596, %v966
        %v997 = vadd.f32 %v599, %v969
        %v998 = vadd.f32 %v604, %v974
        %v999 = vadd.f32 %v607, %v977
        %v1000 = vadd.f32 %v612, %v982
        %v1001 = vadd.f32 %v615, %v985
        %v1002 = vadd.f32 %v620, %v990
        %v1003 = vadd.f32 %v623, %v993
        %v1004 = vmax.f32 %v996, 0.0
        %v1005 = vmax.f32 %v997, 0.0
        %v1006 = vmax.f32 %v998, 0.0
        %v1007 = vmax.f32 %v999, 0.0
        %v1008 = vmax.f32 %v1000, 0.0
        %v1009 = vmax.f32 %v1001, 0.0
        %v1010 = vmax.f32 %v1002, 0.0
        %v1011 = vmax.f32 %v1003, 0.0
        %v1012 = vpack.c.bf16 %v1005, %v1004
        %v1013 = vpack.c.bf16 %v1007, %v1006
        %v1014 = vpack.c.bf16 %v1009, %v1008
        %v1015 = vpack.c.bf16 %v1011, %v1010
        %1016 = vmatprep.subr.bf16.mxu0 0
        %1017 = vmatpush1.bf16.msra.mxu0 %v1012
        %1018 = vmatprep.subr.bf16.mxu0 0
        %1019 = vmatpush1.bf16.msra.mxu0 %v1013
        %1020 = vmatprep.subr.bf16.mxu0 0
        %1021 = vmatpush1.bf16.msra.mxu0 %v1014
        %1022 = vmatprep.subr.bf16.mxu0 0
        %1023 = vmatpush1.bf16.msra.mxu0 %v1015
        %1024 = vmatprep.subr.bf16.mxu0 0
        %1025 = vmatpush1.bf16.msra.mxu0 0
        %1026 = vmatprep.subr.bf16.mxu0 0
        %1027 = vmatpush1.bf16.msra.mxu0 0
        %1028 = vmatprep.subr.bf16.mxu0 0
        %1029 = vmatpush1.bf16.msra.mxu0 0
        %1030 = vmatprep.subr.bf16.mxu0 0
        %1031 = vmatpush1.bf16.msra.mxu0 0
        %1032 = vmatprep.subr.bf16.mxu0 0
        %1033 = vmatpush1.bf16.msra.mxu0 0
        %1034 = vmatprep.subr.bf16.mxu0 0
        %1035 = vmatpush1.bf16.msra.mxu0 0
        %1036 = vmatprep.subr.bf16.mxu0 0
        %1037 = vmatpush1.bf16.msra.mxu0 0
        %1038 = vmatprep.subr.bf16.mxu0 0
        %1039 = vmatpush1.bf16.msra.mxu0 0
        %1040 = vmatprep.subr.bf16.mxu0 0
        %1041 = vmatpush1.bf16.msra.mxu0 0
        %1042 = vmatprep.subr.bf16.mxu0 0
        %1043 = vmatpush1.bf16.msra.mxu0 0
        %1044 = vmatprep.subr.bf16.mxu0 0
        %1045 = vmatpush1.bf16.msra.mxu0 0
        %1046 = vmatprep.subr.bf16.mxu0 0
        %1047 = vmatpush1.bf16.msra.mxu0 0
        %1048 = vmatprep.mubr.bf16.mxu0 0
        %1049 = vmatmul.mubr.bf16.gmra.mrb[0].mxu0 %v660
        %v1050 = vpop.f32.mrb[0].mxu0
        %v1051 = vadd.f32 0.0, %v1050
        %v1052 = vpop.f32.mrb[0].mxu0
        %v1053 = vpop.f32.mrb[0].mxu0
        %v1054 = vadd.f32 0.0, %v1053
        %v1055 = vpop.f32.mrb[0].mxu0
        %1056 = vmatprep.mubr.bf16.mxu0 0
        %1057 = vmatmul.mubr.bf16.gmra.mrb[0].mxu0 %v663
        %v1058 = vpop.f32.mrb[0].mxu0
        %v1059 = vadd.f32 0.0, %v1058
        %v1060 = vpop.f32.mrb[0].mxu0
        %v1061 = vpop.f32.mrb[0].mxu0
        %v1062 = vadd.f32 0.0, %v1061
        %v1063 = vpop.f32.mrb[0].mxu0
        %1064 = vmatprep.mubr.bf16.mxu0 0
        %1065 = vmatmul.mubr.bf16.gmra.mrb[0].mxu0 %v666
        %v1066 = vpop.f32.mrb[0].mxu0
        %v1067 = vadd.f32 0.0, %v1066
        %v1068 = vpop.f32.mrb[0].mxu0
        %v1069 = vpop.f32.mrb[0].mxu0
        %v1070 = vadd.f32 0.0, %v1069
        %v1071 = vpop.f32.mrb[0].mxu0
        %1072 = vmatprep.mubr.bf16.mxu0 0
        %1073 = vmatmul.mubr.bf16.gmra.mrb[0].mxu0 %v669
        %v1074 = vpop.f32.mrb[0].mxu0
        %v1075 = vadd.f32 0.0, %v1074
        %v1076 = vpop.f32.mrb[0].mxu0
        %v1077 = vpop.f32.mrb[0].mxu0
        %v1078 = vadd.f32 0.0, %v1077
        %v1079 = vpop.f32.mrb[0].mxu0
        %1080 = vdwg.mxu0
        %v1081 = vpack.c.bf16 %v1054, %v1051
        %v1082 = vpack.c.bf16 %v1062, %v1059
        %v1083 = vpack.c.bf16 %v1070, %v1067
        %v1084 = vpack.c.bf16 %v1078, %v1075
        %v1089 = vunpack.c.l.b16 %v507
        %v1090 = vunpack.c.l.b16 %v508
        %v1091 = vunpack.c.l.b16 %v509
        %v1092 = vunpack.c.l.b16 %v510
        %v1093 = vpack.c.b16 %v1090, %v1089
        %v1094 = vpack.c.b16 %v1092, %v1091
        %v1098 = vsel %vm752, %v1081, 0
        %v1101 = vsel %vm752, %v1082, 0
        %v1104 = vsel %vm752, %v1083, 0
        %v1107 = vsel %vm752, %v1084, 0
        %1109 = vmatprep.subr.bf16.mxu0 0
        %1110 = vmatpush1.bf16.msra.mxu0 %v1093
        %1111 = vmatprep.subr.bf16.mxu0 0
        %1112 = vmatpush1.bf16.msra.mxu0 %v1094
        %1113 = vmatprep.subr.bf16.mxu0 0
        %1114 = vmatpush1.bf16.msra.mxu0 0
        %1115 = vmatprep.subr.bf16.mxu0 0
        %1116 = vmatpush1.bf16.msra.mxu0 0
        %1117 = vmatprep.subr.bf16.mxu0 0
        %1118 = vmatpush1.bf16.msra.mxu0 0
        %1119 = vmatprep.subr.bf16.mxu0 0
        %1120 = vmatpush1.bf16.msra.mxu0 0
        %1121 = vmatprep.subr.bf16.mxu0 0
        %1122 = vmatpush1.bf16.msra.mxu0 0
        %1123 = vmatprep.subr.bf16.mxu0 0
        %1124 = vmatpush1.bf16.msra.mxu0 0
        %1125 = vmatprep.subr.bf16.mxu0 0
        %1126 = vmatpush1.bf16.msra.mxu0 0
        %1127 = vmatprep.subr.bf16.mxu0 0
        %1128 = vmatpush1.bf16.msra.mxu0 0
        %1129 = vmatprep.subr.bf16.mxu0 0
        %1130 = vmatpush1.bf16.msra.mxu0 0
        %1131 = vmatprep.subr.bf16.mxu0 0
        %1132 = vmatpush1.bf16.msra.mxu0 0
        %1133 = vmatprep.subr.bf16.mxu0 0
        %1134 = vmatpush1.bf16.msra.mxu0 0
        %1135 = vmatprep.subr.bf16.mxu0 0
        %1136 = vmatpush1.bf16.msra.mxu0 0
        %1137 = vmatprep.subr.bf16.mxu0 0
        %1138 = vmatpush1.bf16.msra.mxu0 0
        %1139 = vmatprep.subr.bf16.mxu0 0
        %1140 = vmatpush1.bf16.msra.mxu0 0
        %1141 = vmatprep.mubr.bf16.mxu0 0
        %1142 = vmatmul.mubr.bf16.gmra.mrb[0].mxu0 %v1098
        %v1143 = vpop.f32.mrb[0].mxu0
        %v1144 = vadd.f32 0.0, %v1143
        %v1145 = vpop.f32.mrb[0].mxu0
        %v1146 = vpop.f32.mrb[0].mxu0
        %v1147 = vadd.f32 0.0, %v1146
        %v1148 = vpop.f32.mrb[0].mxu0
        %1149 = vmatprep.mubr.bf16.mxu0 0
        %1150 = vmatmul.mubr.bf16.gmra.mrb[0].mxu0 %v1101
        %v1151 = vpop.f32.mrb[0].mxu0
        %v1152 = vadd.f32 0.0, %v1151
        %v1153 = vpop.f32.mrb[0].mxu0
        %v1154 = vpop.f32.mrb[0].mxu0
        %v1155 = vadd.f32 0.0, %v1154
        %v1156 = vpop.f32.mrb[0].mxu0
        %1157 = vmatprep.mubr.bf16.mxu0 0
        %1158 = vmatmul.mubr.bf16.gmra.mrb[0].mxu0 %v1104
        %v1159 = vpop.f32.mrb[0].mxu0
        %v1160 = vadd.f32 0.0, %v1159
        %v1161 = vpop.f32.mrb[0].mxu0
        %v1162 = vpop.f32.mrb[0].mxu0
        %v1163 = vadd.f32 0.0, %v1162
        %v1164 = vpop.f32.mrb[0].mxu0
        %1165 = vmatprep.mubr.bf16.mxu0 0
        %1166 = vmatmul.mubr.bf16.gmra.mrb[0].mxu0 %v1107
        %v1167 = vpop.f32.mrb[0].mxu0
        %v1168 = vadd.f32 0.0, %v1167
        %v1169 = vpop.f32.mrb[0].mxu0
        %v1170 = vpop.f32.mrb[0].mxu0
        %v1171 = vadd.f32 0.0, %v1170
        %v1172 = vpop.f32.mrb[0].mxu0
        %1173 = vdwg.mxu0
        %v1176 = vunpack.c.l.b16 %v505
        %v1177 = vunpack.c.l.b16 %v506
        %v1178 = vpack.c.b16 %v1177, %v1176
        %1180 = vmatprep.subr.bf16.mxu0 0
        %1181 = vmatpush1.bf16.msra.mxu0 %v1178
        %1182 = vmatprep.subr.bf16.mxu0 0
        %1183 = vmatpush1.bf16.msra.mxu0 0
        %1184 = vmatprep.subr.bf16.mxu0 0
        %1185 = vmatpush1.bf16.msra.mxu0 0
        %1186 = vmatprep.subr.bf16.mxu0 0
        %1187 = vmatpush1.bf16.msra.mxu0 0
        %1188 = vmatprep.subr.bf16.mxu0 0
        %1189 = vmatpush1.bf16.msra.mxu0 0
        %1190 = vmatprep.subr.bf16.mxu0 0
        %1191 = vmatpush1.bf16.msra.mxu0 0
        %1192 = vmatprep.subr.bf16.mxu0 0
        %1193 = vmatpush1.bf16.msra.mxu0 0
        %1194 = vmatprep.subr.bf16.mxu0 0
        %1195 = vmatpush1.bf16.msra.mxu0 0
        %1196 = vmatprep.subr.bf16.mxu0 0
        %1197 = vmatpush1.bf16.msra.mxu0 0
        %1198 = vmatprep.subr.bf16.mxu0 0
        %1199 = vmatpush1.bf16.msra.mxu0 0
        %1200 = vmatprep.subr.bf16.mxu0 0
        %1201 = vmatpush1.bf16.msra.mxu0 0
        %1202 = vmatprep.subr.bf16.mxu0 0
        %1203 = vmatpush1.bf16.msra.mxu0 0
        %1204 = vmatprep.subr.bf16.mxu0 0
        %1205 = vmatpush1.bf16.msra.mxu0 0
        %1206 = vmatprep.subr.bf16.mxu0 0
        %1207 = vmatpush1.bf16.msra.mxu0 0
        %1208 = vmatprep.subr.bf16.mxu0 0
        %1209 = vmatpush1.bf16.msra.mxu0 0
        %1210 = vmatprep.subr.bf16.mxu0 0
        %1211 = vmatpush1.bf16.msra.mxu0 0
        %1212 = vmatprep.mubr.bf16.mxu0 0
        %1213 = vmatmul.mubr.bf16.gmra.mrb[0].mxu0 %v550
        %v1214 = vpop.f32.mrb[0].mxu0
        %v1215 = vadd.f32 %v1144, %v1214
        %v1216 = vpop.f32.mrb[0].mxu0
        %v1217 = vpop.f32.mrb[0].mxu0
        %v1218 = vadd.f32 %v1147, %v1217
        %v1219 = vpop.f32.mrb[0].mxu0
        %1220 = vmatprep.mubr.bf16.mxu0 0
        %1221 = vmatmul.mubr.bf16.gmra.mrb[0].mxu0 %v553
        %v1222 = vpop.f32.mrb[0].mxu0
        %v1223 = vadd.f32 %v1152, %v1222
        %v1224 = vpop.f32.mrb[0].mxu0
        %v1225 = vpop.f32.mrb[0].mxu0
        %v1226 = vadd.f32 %v1155, %v1225
        %v1227 = vpop.f32.mrb[0].mxu0
        %1228 = vmatprep.mubr.bf16.mxu0 0
        %1229 = vmatmul.mubr.bf16.gmra.mrb[0].mxu0 %v556
        %v1230 = vpop.f32.mrb[0].mxu0
        %v1231 = vadd.f32 %v1160, %v1230
        %v1232 = vpop.f32.mrb[0].mxu0
        %v1233 = vpop.f32.mrb[0].mxu0
        %v1234 = vadd.f32 %v1163, %v1233
        %v1235 = vpop.f32.mrb[0].mxu0
        %1236 = vmatprep.mubr.bf16.mxu0 0
        %1237 = vmatmul.mubr.bf16.gmra.mrb[0].mxu0 %v559
        %v1238 = vpop.f32.mrb[0].mxu0
        %v1239 = vadd.f32 %v1168, %v1238
        %v1240 = vpop.f32.mrb[0].mxu0
        %v1241 = vpop.f32.mrb[0].mxu0
        %v1242 = vadd.f32 %v1171, %v1241
        %v1243 = vpop.f32.mrb[0].mxu0
        %1244 = vdwg.mxu0
        %v1246 = vlaneseq
        %v1247 = vshrl.u32 %v1246, 7
        %v1248 = vsub.s32 0, %v1247
        %v1249 = vrot.slane %v511, %v1248
        %v1251 = vadd.f32 %v1215, %v1249
        %v1252 = vadd.f32 %v1218, %v1249
        %v1253 = vadd.f32 %v1223, %v1249
        %v1254 = vadd.f32 %v1226, %v1249
        %v1255 = vadd.f32 %v1231, %v1249
        %v1256 = vadd.f32 %v1234, %v1249
        %v1257 = vadd.f32 %v1239, %v1249
        %v1258 = vadd.f32 %v1242, %v1249
        %v1259 = vmax.f32 %v1251, 0.0
        %v1260 = vmax.f32 %v1252, 0.0
        %v1261 = vmax.f32 %v1253, 0.0
        %v1262 = vmax.f32 %v1254, 0.0
        %v1263 = vmax.f32 %v1255, 0.0
        %v1264 = vmax.f32 %v1256, 0.0
        %v1265 = vmax.f32 %v1257, 0.0
        %v1266 = vmax.f32 %v1258, 0.0
        %v1267 = vlaneseq
        %v1268 = vshrl.u32 %v1267, 7
        %v1269 = vsub.s32 0, %v1268
        %v1270 = vrot.slane %v498, %v1269
        %1272 = vbcast.lane.b32.xlu0 %v1270, 256
        %v1273 = vpop.permute.xlu0 %1272
        %v1274 = vlaneseq
        %v1275 = vshrl.u32 %v1274, 7
        %v1276 = vsub.s32 1, %v1275
        %v1277 = vrot.slane %v498, %v1276
        %1279 = vbcast.lane.b32.xlu0 %v1277, 256
        %v1280 = vpop.permute.xlu0 %1279
        %v1281 = vlaneseq
        %v1282 = vshrl.u32 %v1281, 7
        %v1283 = vsub.s32 2, %v1282
        %v1284 = vrot.slane %v498, %v1283
        %1286 = vbcast.lane.b32.xlu0 %v1284, 256
        %v1287 = vpop.permute.xlu0 %1286
        %v1288 = vlaneseq
        %v1289 = vshrl.u32 %v1288, 7
        %v1290 = vsub.s32 3, %v1289
        %v1291 = vrot.slane %v498, %v1290
        %1293 = vbcast.lane.b32.xlu0 %v1291, 256
        %v1294 = vpop.permute.xlu0 %1293
        %v1295 = vlaneseq
        %v1296 = vshrl.u32 %v1295, 7
        %v1297 = vsub.s32 4, %v1296
        %v1298 = vrot.slane %v498, %v1297
        %1300 = vbcast.lane.b32.xlu0 %v1298, 256
        %v1301 = vpop.permute.xlu0 %1300
        %v1302 = vlaneseq
        %v1303 = vshrl.u32 %v1302, 7
        %v1304 = vsub.s32 5, %v1303
        %v1305 = vrot.slane %v498, %v1304
        %1307 = vbcast.lane.b32.xlu0 %v1305, 256
        %v1308 = vpop.permute.xlu0 %1307
        %v1309 = vlaneseq
        %v1310 = vshrl.u32 %v1309, 7
        %v1311 = vsub.s32 6, %v1310
        %v1312 = vrot.slane %v498, %v1311
        %1314 = vbcast.lane.b32.xlu0 %v1312, 256
        %v1315 = vpop.permute.xlu0 %1314
        %v1316 = vlaneseq
        %v1317 = vshrl.u32 %v1316, 7
        %v1318 = vsub.s32 7, %v1317
        %v1319 = vrot.slane %v498, %v1318
        %1321 = vbcast.lane.b32.xlu0 %v1319, 256
        %v1322 = vpop.permute.xlu0 %1321
        %v1323 = vmul.f32 %v1259, %v1273
        %v1324 = vmul.f32 %v1260, %v1280
        %v1325 = vmul.f32 %v1261, %v1287
        %v1326 = vmul.f32 %v1262, %v1294
        %v1327 = vmul.f32 %v1263, %v1301
        %v1328 = vmul.f32 %v1264, %v1308
        %v1329 = vmul.f32 %v1265, %v1315
        %v1330 = vmul.f32 %v1266, %v1322
        %vm1331 = vcmask 64512
        %v1332 = vsel %vm1331, %v498, 0.0
        %1333 = vadd.xlane.f32.xlu0 %v1332
        %v1334 = vpop.xlane.xlu0 %1333
        %v1335 = vmax.f32 %v1334, 1.0
        %v1336 = vsel %vm752, %v1323, 0.0
        %v1337 = vrot.slane %v1336, 4
        %v1338 = vadd.f32 %v1336, %v1337
        %v1339 = vrot.slane %v1338, 2
        %v1340 = vadd.f32 %v1338, %v1339
        %v1341 = vrot.slane %v1340, 1
        %v1342 = vadd.f32 %v1340, %v1341
        %v1343 = vsel %vm752, %v1324, 0.0
        %v1344 = vrot.slane %v1343, 4
        %v1345 = vadd.f32 %v1343, %v1344
        %v1346 = vrot.slane %v1345, 2
        %v1347 = vadd.f32 %v1345, %v1346
        %v1348 = vrot.slane %v1347, 1
        %v1349 = vadd.f32 %v1347, %v1348
        %v1350 = vsel %vm752, %v1325, 0.0
        %v1351 = vrot.slane %v1350, 4
        %v1352 = vadd.f32 %v1350, %v1351
        %v1353 = vrot.slane %v1352, 2
        %v1354 = vadd.f32 %v1352, %v1353
        %v1355 = vrot.slane %v1354, 1
        %v1356 = vadd.f32 %v1354, %v1355
        %v1357 = vsel %vm752, %v1326, 0.0
        %v1358 = vrot.slane %v1357, 4
        %v1359 = vadd.f32 %v1357, %v1358
        %v1360 = vrot.slane %v1359, 2
        %v1361 = vadd.f32 %v1359, %v1360
        %v1362 = vrot.slane %v1361, 1
        %v1363 = vadd.f32 %v1361, %v1362
        %v1364 = vsel %vm752, %v1327, 0.0
        %v1365 = vrot.slane %v1364, 4
        %v1366 = vadd.f32 %v1364, %v1365
        %v1367 = vrot.slane %v1366, 2
        %v1368 = vadd.f32 %v1366, %v1367
        %v1369 = vrot.slane %v1368, 1
        %v1370 = vadd.f32 %v1368, %v1369
        %v1371 = vsel %vm752, %v1328, 0.0
        %v1372 = vrot.slane %v1371, 4
        %v1373 = vadd.f32 %v1371, %v1372
        %v1374 = vrot.slane %v1373, 2
        %v1375 = vadd.f32 %v1373, %v1374
        %v1376 = vrot.slane %v1375, 1
        %v1377 = vadd.f32 %v1375, %v1376
        %v1378 = vsel %vm752, %v1329, 0.0
        %v1379 = vrot.slane %v1378, 4
        %v1380 = vadd.f32 %v1378, %v1379
        %v1381 = vrot.slane %v1380, 2
        %v1382 = vadd.f32 %v1380, %v1381
        %v1383 = vrot.slane %v1382, 1
        %v1384 = vadd.f32 %v1382, %v1383
        %v1385 = vsel %vm752, %v1330, 0.0
        %v1386 = vrot.slane %v1385, 4
        %v1387 = vadd.f32 %v1385, %v1386
        %v1388 = vrot.slane %v1387, 2
        %v1389 = vadd.f32 %v1387, %v1388
        %v1390 = vrot.slane %v1389, 1
        %v1391 = vadd.f32 %v1389, %v1390
        %v1392 = vrcp.pop %v1335
        %v1394 = vrot.slane %v1392, 1
        %v1395 = vrot.slane %v1392, 2
        %v1396 = vrot.slane %v1392, 3
        %v1397 = vrot.slane %v1392, 4
        %v1398 = vrot.slane %v1392, 5
        %v1399 = vrot.slane %v1392, 6
        %v1400 = vrot.slane %v1392, 7
        %v1409 = vmul.f32 %v1342, %v1392
        %v1410 = vmul.f32 %v1349, %v1394
        %v1411 = vmul.f32 %v1356, %v1395
        %v1412 = vmul.f32 %v1363, %v1396
        %v1413 = vmul.f32 %v1370, %v1397
        %v1414 = vmul.f32 %v1377, %v1398
        %v1415 = vmul.f32 %v1384, %v1399
        %v1416 = vmul.f32 %v1391, %v1400
        %v1417 = vpack.c.bf16 %v1409, %v1409
        %v1418 = vpack.c.bf16 %v1410, %v1410
        %v1419 = vpack.c.bf16 %v1411, %v1411
        %v1420 = vpack.c.bf16 %v1412, %v1412
        %v1421 = vpack.c.bf16 %v1413, %v1413
        %v1422 = vpack.c.bf16 %v1414, %v1414
        %v1423 = vpack.c.bf16 %v1415, %v1415
        %v1424 = vpack.c.bf16 %v1416, %v1416
        %v1426 = vlaneseq
        %v1427 = vshrl.u32 %v1426, 7
        %v1428 = vsub.s32 0, %v1427
        %v1429 = vrot.slane %v516, %v1428
        %v1439 = vunpack.c.l.b16 %v1417
        %v1440 = vunpack.c.l.b16 %v1418
        %v1441 = vunpack.c.l.b16 %v1419
        %v1442 = vunpack.c.l.b16 %v1420
        %v1443 = vunpack.c.l.b16 %v1421
        %v1444 = vunpack.c.l.b16 %v1422
        %v1445 = vunpack.c.l.b16 %v1423
        %v1446 = vunpack.c.l.b16 %v1424
        %v1447 = vrot.slane %v1440, 7
        %vm1448 = vcmask 1041409
        %v1449 = vsel %vm1448, %v1447, %v1439
        %v1450 = vrot.slane %v1441, 6
        %vm1451 = vcmask 1042434
        %v1452 = vsel %vm1451, %v1450, %v1449
        %v1453 = vrot.slane %v1442, 5
        %vm1454 = vcmask 1043459
        %v1455 = vsel %vm1454, %v1453, %v1452
        %v1456 = vrot.slane %v1443, 4
        %vm1457 = vcmask 1044484
        %v1458 = vsel %vm1457, %v1456, %v1455
        %v1459 = vrot.slane %v1444, 3
        %vm1460 = vcmask 1045509
        %v1461 = vsel %vm1460, %v1459, %v1458
        %v1462 = vrot.slane %v1445, 2
        %vm1463 = vcmask 1046534
        %v1464 = vsel %vm1463, %v1462, %v1461
        %v1465 = vrot.slane %v1446, 1
        %vm1466 = vcmask 1047559
        %v1467 = vsel %vm1466, %v1465, %v1464
        %v1468 = vpack.c.b16 %v1467, %v1467
        %v1473 = vunpack.c.l.b16 %v512
        %v1474 = vunpack.c.l.b16 %v513
        %v1475 = vunpack.c.l.b16 %v514
        %v1476 = vunpack.c.l.b16 %v515
        %v1477 = vpack.c.b16 %v1474, %v1473
        %v1478 = vpack.c.b16 %v1476, %v1475
        %v1482 = vsel %vm752, %v1468, 0
        %1484 = vmatprep.subr.bf16.mxu0 0
        %1485 = vmatpush1.bf16.msra.mxu0 %v1477
        %1486 = vmatprep.subr.bf16.mxu0 0
        %1487 = vmatpush1.bf16.msra.mxu0 %v1478
        %1488 = vmatprep.subr.bf16.mxu0 0
        %1489 = vmatpush1.bf16.msra.mxu0 0
        %1490 = vmatprep.subr.bf16.mxu0 0
        %1491 = vmatpush1.bf16.msra.mxu0 0
        %1492 = vmatprep.subr.bf16.mxu0 0
        %1493 = vmatpush1.bf16.msra.mxu0 0
        %1494 = vmatprep.subr.bf16.mxu0 0
        %1495 = vmatpush1.bf16.msra.mxu0 0
        %1496 = vmatprep.subr.bf16.mxu0 0
        %1497 = vmatpush1.bf16.msra.mxu0 0
        %1498 = vmatprep.subr.bf16.mxu0 0
        %1499 = vmatpush1.bf16.msra.mxu0 0
        %1500 = vmatprep.subr.bf16.mxu0 0
        %1501 = vmatpush1.bf16.msra.mxu0 0
        %1502 = vmatprep.subr.bf16.mxu0 0
        %1503 = vmatpush1.bf16.msra.mxu0 0
        %1504 = vmatprep.subr.bf16.mxu0 0
        %1505 = vmatpush1.bf16.msra.mxu0 0
        %1506 = vmatprep.subr.bf16.mxu0 0
        %1507 = vmatpush1.bf16.msra.mxu0 0
        %1508 = vmatprep.subr.bf16.mxu0 0
        %1509 = vmatpush1.bf16.msra.mxu0 0
        %1510 = vmatprep.subr.bf16.mxu0 0
        %1511 = vmatpush1.bf16.msra.mxu0 0
        %1512 = vmatprep.subr.bf16.mxu0 0
        %1513 = vmatpush1.bf16.msra.mxu0 0
        %1514 = vmatprep.subr.bf16.mxu0 0
        %1515 = vmatpush1.bf16.msra.mxu0 0
        %1516 = vmatprep.mubr.bf16.mxu0 0
        %1517 = vmatmul.mubr.bf16.gmra.mrb[0].mxu0 %v1482
        %v1518 = vpop.f32.mrb[0].mxu0
        %v1519 = vadd.f32 %v1429, %v1518
        %v1520 = vpop.f32.mrb[0].mxu0
        %v1521 = vpop.f32.mrb[0].mxu0
        %v1522 = vpop.f32.mrb[0].mxu0
        %1523 = vdwg.mxu0
        %v1524 = vmax.f32 %v1519, 0.0
        %v1525 = vpack.c.bf16 %v1524, %v1524
        %v1527 = vlaneseq
        %v1528 = vshrl.u32 %v1527, 7
        %v1529 = vsub.s32 0, %v1528
        %v1530 = vrot.slane %v521, %v1529
        %v1536 = vunpack.c.l.b16 %v517
        %v1537 = vunpack.c.l.b16 %v518
        %v1538 = vunpack.c.l.b16 %v519
        %v1539 = vunpack.c.l.b16 %v520
        %v1540 = vpack.c.b16 %v1537, %v1536
        %v1541 = vpack.c.b16 %v1539, %v1538
        %v1545 = vsel %vm752, %v1525, 0
        %1547 = vmatprep.subr.bf16.mxu0 0
        %1548 = vmatpush1.bf16.msra.mxu0 %v1540
        %1549 = vmatprep.subr.bf16.mxu0 0
        %1550 = vmatpush1.bf16.msra.mxu0 %v1541
        %1551 = vmatprep.subr.bf16.mxu0 0
        %1552 = vmatpush1.bf16.msra.mxu0 0
        %1553 = vmatprep.subr.bf16.mxu0 0
        %1554 = vmatpush1.bf16.msra.mxu0 0
        %1555 = vmatprep.subr.bf16.mxu0 0
        %1556 = vmatpush1.bf16.msra.mxu0 0
        %1557 = vmatprep.subr.bf16.mxu0 0
        %1558 = vmatpush1.bf16.msra.mxu0 0
        %1559 = vmatprep.subr.bf16.mxu0 0
        %1560 = vmatpush1.bf16.msra.mxu0 0
        %1561 = vmatprep.subr.bf16.mxu0 0
        %1562 = vmatpush1.bf16.msra.mxu0 0
        %1563 = vmatprep.subr.bf16.mxu0 0
        %1564 = vmatpush1.bf16.msra.mxu0 0
        %1565 = vmatprep.subr.bf16.mxu0 0
        %1566 = vmatpush1.bf16.msra.mxu0 0
        %1567 = vmatprep.subr.bf16.mxu0 0
        %1568 = vmatpush1.bf16.msra.mxu0 0
        %1569 = vmatprep.subr.bf16.mxu0 0
        %1570 = vmatpush1.bf16.msra.mxu0 0
        %1571 = vmatprep.subr.bf16.mxu0 0
        %1572 = vmatpush1.bf16.msra.mxu0 0
        %1573 = vmatprep.subr.bf16.mxu0 0
        %1574 = vmatpush1.bf16.msra.mxu0 0
        %1575 = vmatprep.subr.bf16.mxu0 0
        %1576 = vmatpush1.bf16.msra.mxu0 0
        %1577 = vmatprep.subr.bf16.mxu0 0
        %1578 = vmatpush1.bf16.msra.mxu0 0
        %1579 = vmatprep.mubr.bf16.mxu0 0
        %1580 = vmatmul.mubr.bf16.gmra.mrb[0].mxu0 %v1545
        %v1581 = vpop.f32.mrb[0].mxu0
        %v1582 = vadd.f32 %v1530, %v1581
        %v1583 = vpop.f32.mrb[0].mxu0
        %v1584 = vpop.f32.mrb[0].mxu0
        %v1585 = vpop.f32.mrb[0].mxu0
        %1586 = vdwg.mxu0
        %v1587 = vmul.f32 %v1582, 0.5
        %v1588 = vtanh.pop %v1587
        %v1589 = vadd.f32 %v1588, 1.0
        %v1590 = vmul.f32 %v1589, 0.5
        %1591 = vst [vmem:[%s465] sm:$0xff] %v1590
        %s1592 = sand.u32 %s303, 1
        %s1593 = scalar_lea.sflag [#allocation4], %s1592
        %s1594 = sand.u32 %s303, 1
        %s1595 = smul.addr %s1594, 8
        %s1596 = scalar_lea.vmem [#allocation7], %s1595
        // Predicated region
        $region77: #{tpu_custom_call.1} parent=67 // pred_check
          %p1597 = pneg %p313
        $region78: #{tpu_custom_call.1} parent=67 // pred_check_branch
          %1599 = sbr.rel (%p1597) target = $region80
        $region79: #{tpu_custom_call.1} parent=67 // pred_region
          %s1601 = ssub.s32 128, 128
          %1602 = vsyncadd %s1593, %s1601
          %s1603 = smul.addr %s28, 128
          %s1604 = scalar_lea.hbm %s12, %s1603
          %s1606 = sshll.u32 %s1596, 4
          %s1607 = int_to_ptr.vmem [resolvable:$true] %s1606
          %1609 = dma.vmem_to_hbm [thread:$0]  %s1607, 128, %s1604, %s1593
        $region80: #{tpu_custom_call.1} parent=67 // pred_fallthru
          _
      $region68: #{tpu_custom_call.1} parent=5 // pred_fallthru
        _
      %p1610 = scmp.le.s32.totalorder 2, %s23
      // Predicated region
      $region81: #{tpu_custom_call.1} parent=5 // pred_check
        %p1611 = pneg %p1610
      $region82: #{tpu_custom_call.1} parent=5 // pred_check_branch
        %1613 = sbr.rel (%p1611) target = $region84
      $region83: #{tpu_custom_call.1} parent=5 // pred_region
        %s1614 = ssub.s32 %s23, 2
        // Predicated region
        $region85: #{tpu_custom_call.1} parent=83 // pred_check
          %p1615 = pneg %p319
        $region86: #{tpu_custom_call.1} parent=83 // pred_check_branch
          %1617 = sbr.rel (%p1615) target = $region88
        $region87: #{tpu_custom_call.1} parent=83 // pred_region
          %s1618 = sand.u32 %s304, 1
          %s1619 = scalar_lea.sflag [#allocation4], %s1618
          %s1620 = sand.u32 %s304, 1
          %s1621 = smul.addr %s1620, 8
          %s1622 = scalar_lea.vmem [#allocation7], %s1621
          %1623 = dma.done %s1619, 128
        $region88: #{tpu_custom_call.1} parent=83 // pred_fallthru
          _
      $region84: #{tpu_custom_call.1} parent=5 // pred_fallthru
        _
    $region6: #{tpu_custom_call.1} parent=1 // loop_footer
      %s27 = sadd.s32 1, %s23
    $region7: #{tpu_custom_call.1} parent=1 // loop_footer_branch
      %22 = sbr.rel target = $region3
    $region8: #{tpu_custom_call.1} parent=1 // loop_exit
      _
    %1624 = vsyncpa [#allocation3], 1
    %s1625 = scalar_lea.sflag [#allocation3], 1
    %1626 = vsyncpa %s1625, 1
    %1627 = vsyncpa [#allocation6], 1
    %1628 = vsyncpa [#allocation4], 1
    %s1629 = scalar_lea.sflag [#allocation4], 1
    %1630 = vsyncpa %s1629, 1

</llo_original>
